<compile_context>
chip_gen: v6e
topology: v6e:2x2x1
jax: 0.10.0
libtpu: 0.0.40
codegen_flags: <defaults>
</compile_context>

<pallas_src>
import functools
import math

import jax
import jax.numpy as jnp
from jax.experimental import pallas as pl
from jax.experimental.pallas import tpu as pltpu


LN_EPS = 1e-5  # torch.nn.LayerNorm default


def _transformer_kernel(x_ref,
                        ln1_g, ln1_b, wqkv, bqkv, wo_h, bo,
                        ln2_g, ln2_b, w1, b1, w2, b2,
                        o_ref, acc_ref, *, n_head: int):
    """One (batch, layer) grid step: applies one ResidualAttentionBlock to the sequence
    of the current batch element, carrying the activation in acc_ref across layers.

    Shapes seen by the kernel (leading layer/batch dims squeezed by BlockSpec):
      x_ref, o_ref : (L, E)        acc_ref : (L, E) fp32 scratch
      wqkv : (E, 3E) bf16 (q-scale folded in), bqkv : (1, 3E) fp32
      wo_h : (H, dh, E) bf16,  bo : (1, E) fp32
      w1 : (E, 4E) bf16, b1 : (1, 4E) fp32, w2 : (4E, E) bf16, b2 : (1, E) fp32
      ln*_g / ln*_b : (1, E) fp32
    """
    layer = pl.program_id(1)

    @pl.when(layer == 0)
    def _():
        acc_ref[...] = x_ref[...].astype(jnp.float32)

    x = acc_ref[...]                               # (L, E) fp32 running activation
    L, E = x.shape
    dh = E // n_head

    # ---- LayerNorm 1 (fp32, single pass, reuse x - mu) ----
    mu = jnp.mean(x, axis=-1, keepdims=True)
    xc = x - mu
    var = jnp.mean(xc * xc, axis=-1, keepdims=True)
    h = xc * jax.lax.rsqrt(var + LN_EPS) * ln1_g[...] + ln1_b[...]

    # ---- Fused QKV projection (bf16 MXU, fp32 accum). 1/sqrt(dh) already folded into Wq.
    qkv = jnp.dot(h.astype(jnp.bfloat16), wqkv[...],
                  preferred_element_type=jnp.float32) + bqkv[...]          # (L, 3E)

    # ---- Head split: (H, L, dh) via static lane slices stacked along a new major dim.
    qh = jnp.stack([qkv[:, hd * dh:(hd + 1) * dh] for hd in range(n_head)], axis=0)
    kh = jnp.stack([qkv[:, E + hd * dh:E + (hd + 1) * dh] for hd in range(n_head)], axis=0)
    vh = jnp.stack([qkv[:, 2 * E + hd * dh:2 * E + (hd + 1) * dh] for hd in range(n_head)], axis=0)

    # ---- Batched attention over heads (batch dim = H) ----
    s = jax.lax.dot_general(qh.astype(jnp.bfloat16), kh.astype(jnp.bfloat16),
                            (((2,), (2,)), ((0,), (0,))),
                            preferred_element_type=jnp.float32)             # (H, L, L)
    s = s - jnp.max(s, axis=-1, keepdims=True)
    p = jnp.exp(s)
    p = p * pl.reciprocal(jnp.sum(p, axis=-1, keepdims=True), approx=True)
    ctx = jax.lax.dot_general(p.astype(jnp.bfloat16), vh.astype(jnp.bfloat16),
                              (((2,), (1,)), ((0,), (0,))),
                              preferred_element_type=jnp.float32)           # (H, L, dh)

    # ---- Output projection: per-head batched dot against (H, dh, E), then sum heads.
    attn_ph = jax.lax.dot_general(ctx.astype(jnp.bfloat16), wo_h[...],
                                  (((2,), (1,)), ((0,), (0,))),
                                  preferred_element_type=jnp.float32)       # (H, L, E)
    attn = attn_ph[0]
    for hd in range(1, n_head):                    # unrolled VPU adds (== sum over heads)
        attn = attn + attn_ph[hd]
    attn = attn + bo[...]

    x = x + attn                                   # residual 1 (DropPath is identity)

    # ---- LayerNorm 2 (fp32) ----
    mu2 = jnp.mean(x, axis=-1, keepdims=True)
    xc2 = x - mu2
    var2 = jnp.mean(xc2 * xc2, axis=-1, keepdims=True)
    h2 = xc2 * jax.lax.rsqrt(var2 + LN_EPS) * ln2_g[...] + ln2_b[...]

    # ---- MLP: Linear(E,4E) -> QuickGELU -> Linear(4E,E), bf16 MXU / fp32 elementwise ----
    u = jnp.dot(h2.astype(jnp.bfloat16), w1[...],
                preferred_element_type=jnp.float32) + b1[...]               # (L, 4E)
    u = u * jax.nn.sigmoid(1.702 * u)                                       # QuickGELU (fp32)
    m = jnp.dot(u.astype(jnp.bfloat16), w2[...],
                preferred_element_type=jnp.float32) + b2[...]               # (L, E)

    x = x + m                                      # residual 2
    acc_ref[...] = x                               # carry to next layer

    @pl.when(layer == pl.num_programs(1) - 1)
    def _():
        o_ref[...] = x.astype(o_ref.dtype)


_WEIGHT_ORDER = ("ln1_g", "ln1_b", "wqkv", "bqkv", "wo_h", "bo",
                 "ln2_g", "ln2_b", "w1", "b1", "w2", "b2")


def transformer_forward(x_lne, params, n_head):
    """Equivalent of Transformer.forward.

    x_lne  : (L, N, E) — PyTorch (seq, batch, embed) convention.
    params : dict of layer-stacked arrays (see init_params), weights pre-transposed for h @ W.
    """
    L, N, E = x_lne.shape
    # One transpose per forward pass (layers are fused into a single pallas_call).
    x = jnp.transpose(x_lne, (1, 0, 2))            # (N, L, E)
    layers = params["wqkv"].shape[0]

    weight_args = [params[k] for k in _WEIGHT_ORDER]

    def wspec(arr):
        rank = arr.ndim
        block = (None,) + arr.shape[1:]            # squeeze the layer dim
        return pl.BlockSpec(block, lambda n, l, _r=rank: (l,) + (0,) * (_r - 1))

    in_specs = [pl.BlockSpec((None, L, E), lambda n, l: (n, 0, 0))]
    in_specs += [wspec(w) for w in weight_args]

    kernel = functools.partial(_transformer_kernel, n_head=n_head)
    out = pl.pallas_call(
        kernel,
        out_shape=jax.ShapeDtypeStruct((N, L, E), x.dtype),
        grid=(N, layers),
        in_specs=in_specs,
        out_specs=pl.BlockSpec((None, L, E), lambda n, l: (n, 0, 0)),
        scratch_shapes=[pltpu.VMEM((L, E), jnp.float32)],
        compiler_params=pltpu.CompilerParams(
            dimension_semantics=("parallel", "arbitrary"),
            # Raise above the scoped default so whole-layer bf16 weights + double buffers fit.
            vmem_limit_bytes=64 * 1024 * 1024),
    )(x, *weight_args)
    return jnp.transpose(out, (1, 0, 2))           # back to (L, N, E)


def init_params(key, width, layers, n_head):
    """Deterministic synthetic parameters, pre-packed for the kernel:
       - weights transposed for `h @ W`, cast to bf16 (MXU inputs)
       - q/k/v fused into one (E, 3E) matrix with 1/sqrt(dh) folded into the q columns
       - out-proj reshaped to head-major (H, dh, E)
       - biases / LN params kept fp32, stacked with a leading layer dim."""
    E = width
    dh = E // n_head
    scale = 1.0 / math.sqrt(dh)
    std = 0.02

    acc = {k: [] for k in _WEIGHT_ORDER}
    for i in range(layers):
        ks = jax.random.split(jax.random.fold_in(key, i), 6)
        wq = std * jax.random.normal(ks[0], (E, E), jnp.float32)
        wk = std * jax.random.normal(ks[1], (E, E), jnp.float32)
        wv = std * jax.random.normal(ks[2], (E, E), jnp.float32)
        wo = std * jax.random.normal(ks[3], (E, E), jnp.float32)
        w1 = std * jax.random.normal(ks[4], (E, 4 * E), jnp.float32)
        w2 = std * jax.random.normal(ks[5], (4 * E, E), jnp.float32)

        # Fold the attention scale into Wq (bq is zero here; a nonzero bq must be scaled too).
        acc["wqkv"].append(jnp.concatenate([wq * scale, wk, wv], axis=1).astype(jnp.bfloat16))
        acc["bqkv"].append(jnp.zeros((1, 3 * E), jnp.float32))
        acc["wo_h"].append(wo.reshape(n_head, dh, E).astype(jnp.bfloat16))
        acc["bo"].append(jnp.zeros((1, E), jnp.float32))
        acc["ln1_g"].append(jnp.ones((1, E), jnp.float32))
        acc["ln1_b"].append(jnp.zeros((1, E), jnp.float32))
        acc["ln2_g"].append(jnp.ones((1, E), jnp.float32))
        acc["ln2_b"].append(jnp.zeros((1, E), jnp.float32))
        acc["w1"].append(w1.astype(jnp.bfloat16))
        acc["b1"].append(jnp.zeros((1, 4 * E), jnp.float32))
        acc["w2"].append(w2.astype(jnp.bfloat16))
        acc["b2"].append(jnp.zeros((1, E), jnp.float32))

    return {k: jnp.stack(v, axis=0) for k, v in acc.items()}


if __name__ == "__main__":
    # Small shapes: seq=8, batch=2, width=32, heads=4, layers=2.
    L, N, E, H, LAYERS = 8, 2, 32, 4, 2

    key = jax.random.PRNGKey(0)
    kx, kp = jax.random.split(key)
    x = jax.random.normal(kx, (L, N, E), jnp.float32)   # (seq, batch, width)
    params = init_params(kp, E, LAYERS, H)

    out = transformer_forward(x, params, n_head=H)
    out = jax.block_until_ready(out)
    assert out.shape == (L, N, E) and out.dtype == jnp.float32
    assert bool(jnp.all(jnp.isfinite(out)))
    print("KERNEL_OK")
</pallas_src>

<mosaic_0001>
module attributes {stable_mosaic.version = 11 : i64} {
  func.func @_transformer_kernel(%arg0: i32, %arg1: i32, %arg2: memref<1x8x32xf32, #tpu.memory_space<vmem>>, %arg3: memref<1x1x32xf32, #tpu.memory_space<vmem>>, %arg4: memref<1x1x32xf32, #tpu.memory_space<vmem>>, %arg5: memref<1x32x96xbf16, #tpu.memory_space<vmem>>, %arg6: memref<1x1x96xf32, #tpu.memory_space<vmem>>, %arg7: memref<1x4x8x32xbf16, #tpu.memory_space<vmem>>, %arg8: memref<1x1x32xf32, #tpu.memory_space<vmem>>, %arg9: memref<1x1x32xf32, #tpu.memory_space<vmem>>, %arg10: memref<1x1x32xf32, #tpu.memory_space<vmem>>, %arg11: memref<1x32x128xbf16, #tpu.memory_space<vmem>>, %arg12: memref<1x1x128xf32, #tpu.memory_space<vmem>>, %arg13: memref<1x128x32xbf16, #tpu.memory_space<vmem>>, %arg14: memref<1x1x32xf32, #tpu.memory_space<vmem>>, %arg15: memref<1x8x32xf32, #tpu.memory_space<vmem>>, %arg16: memref<8x32xf32, #tpu.memory_space<vmem>>) attributes {dimension_semantics = [#tpu.dimension_semantics<parallel>, #tpu.dimension_semantics<arbitrary>], iteration_bounds = array<i64: 2, 2>, scalar_prefetch = 0 : i64, scratch_operands = 1 : i64, tpu.core_type = #tpu.core_type<tc>, window_params = [{transform_indices = @transform_0, window_bounds = array<i64: 1, 8, 32>}, {transform_indices = @transform_1, window_bounds = array<i64: 1, 1, 32>}, {transform_indices = @transform_2, window_bounds = array<i64: 1, 1, 32>}, {transform_indices = @transform_3, window_bounds = array<i64: 1, 32, 96>}, {transform_indices = @transform_4, window_bounds = array<i64: 1, 1, 96>}, {transform_indices = @transform_5, window_bounds = array<i64: 1, 4, 8, 32>}, {transform_indices = @transform_6, window_bounds = array<i64: 1, 1, 32>}, {transform_indices = @transform_7, window_bounds = array<i64: 1, 1, 32>}, {transform_indices = @transform_8, window_bounds = array<i64: 1, 1, 32>}, {transform_indices = @transform_9, window_bounds = array<i64: 1, 32, 128>}, {transform_indices = @transform_10, window_bounds = array<i64: 1, 1, 128>}, {transform_indices = @transform_11, window_bounds = array<i64: 1, 128, 32>}, {transform_indices = @transform_12, window_bounds = array<i64: 1, 1, 32>}, {transform_indices = @transform_13, window_bounds = array<i64: 1, 8, 32>}]} {
    %c0_i32 = arith.constant 0 : i32
    %0 = arith.cmpi eq, %arg1, %c0_i32 : i32
    %1 = arith.extui %0 : i1 to i32
    %c0_i32_0 = arith.constant 0 : i32
    %2 = arith.cmpi ne, %1, %c0_i32_0 : i32
    scf.if %2 {
      %c0_61 = arith.constant 0 : index
      %c0_62 = arith.constant 0 : index
      %c0_63 = arith.constant 0 : index
      %152 = vector.load %arg2[%c0_61, %c0_62, %c0_63] : memref<1x8x32xf32, #tpu.memory_space<vmem>>, vector<1x8x32xf32>
      %153 = vector.shape_cast %152 : vector<1x8x32xf32> to vector<8x32xf32>
      %c0_64 = arith.constant 0 : index
      %c0_65 = arith.constant 0 : index
      %154 = vector.load %arg16[%c0_64, %c0_65] : memref<8x32xf32, #tpu.memory_space<vmem>>, vector<8x32xf32>
      tpu.vector_store %arg16[%c0_64, %c0_65], %153 {strides = array<i32>} : memref<8x32xf32, #tpu.memory_space<vmem>>, vector<8x32xf32>,
    } else {
    }
    %c0 = arith.constant 0 : index
    %c0_1 = arith.constant 0 : index
    %3 = vector.load %arg16[%c0, %c0_1] : memref<8x32xf32, #tpu.memory_space<vmem>>, vector<8x32xf32>
    %cst = arith.constant dense<0.000000e+00> : vector<8xf32>
    %4 = vector.multi_reduction <add>, %3, %cst [1] : vector<8x32xf32> to vector<8xf32>
    %5 = vector.shape_cast %4 : vector<8xf32> to vector<8x1xf32>
    %cst_2 = arith.constant 3.200000e+01 : f32
    %6 = vector.broadcast %cst_2 : f32 to vector<8x1xf32>
    %7 = arith.divf %5, %6 : vector<8x1xf32>
    %8 = vector.broadcast %7 : vector<8x1xf32> to vector<8x32xf32>
    %9 = arith.subf %3, %8 : vector<8x32xf32>
    %10 = arith.mulf %9, %9 : vector<8x32xf32>
    %cst_3 = arith.constant dense<0.000000e+00> : vector<8xf32>
    %11 = vector.multi_reduction <add>, %10, %cst_3 [1] : vector<8x32xf32> to vector<8xf32>
    %12 = vector.shape_cast %11 : vector<8xf32> to vector<8x1xf32>
    %cst_4 = arith.constant 3.200000e+01 : f32
    %13 = vector.broadcast %cst_4 : f32 to vector<8x1xf32>
    %14 = arith.divf %12, %13 : vector<8x1xf32>
    %cst_5 = arith.constant 9.99999974E-6 : f32
    %15 = vector.broadcast %cst_5 : f32 to vector<8x1xf32>
    %16 = arith.addf %14, %15 : vector<8x1xf32>
    %17 = math.rsqrt %16 : vector<8x1xf32>
    %18 = vector.broadcast %17 : vector<8x1xf32> to vector<8x32xf32>
    %19 = arith.mulf %9, %18 : vector<8x32xf32>
    %c0_6 = arith.constant 0 : index
    %c0_7 = arith.constant 0 : index
    %c0_8 = arith.constant 0 : index
    %20 = vector.load %arg3[%c0_6, %c0_7, %c0_8] : memref<1x1x32xf32, #tpu.memory_space<vmem>>, vector<1x1x32xf32>
    %21 = vector.shape_cast %20 : vector<1x1x32xf32> to vector<1x32xf32>
    %22 = vector.broadcast %21 : vector<1x32xf32> to vector<8x32xf32>
    %23 = arith.mulf %19, %22 : vector<8x32xf32>
    %c0_9 = arith.constant 0 : index
    %c0_10 = arith.constant 0 : index
    %c0_11 = arith.constant 0 : index
    %24 = vector.load %arg4[%c0_9, %c0_10, %c0_11] : memref<1x1x32xf32, #tpu.memory_space<vmem>>, vector<1x1x32xf32>
    %25 = vector.shape_cast %24 : vector<1x1x32xf32> to vector<1x32xf32>
    %26 = vector.broadcast %25 : vector<1x32xf32> to vector<8x32xf32>
    %27 = arith.addf %23, %26 : vector<8x32xf32>
    %28 = arith.truncf %27 : vector<8x32xf32> to vector<8x32xbf16>
    %c0_12 = arith.constant 0 : index
    %c0_13 = arith.constant 0 : index
    %c0_14 = arith.constant 0 : index
    %29 = vector.load %arg5[%c0_12, %c0_13, %c0_14] : memref<1x32x96xbf16, #tpu.memory_space<vmem>>, vector<1x32x96xbf16>
    %30 = vector.shape_cast %29 : vector<1x32x96xbf16> to vector<32x96xbf16>
    %cst_15 = arith.constant dense<0.000000e+00> : vector<8x96xf32>
    %31 = tpu.matmul %28, %30, %cst_15 {dimension_numbers = #tpu.dot_dimension_numbers<[1], [0], [0], [1], [0, 0, 1, 1], [], []>} : vector<8x32xbf16>, vector<32x96xbf16>, vector<8x96xf32> -> vector<8x96xf32>
    %c0_16 = arith.constant 0 : index
    %c0_17 = arith.constant 0 : index
    %c0_18 = arith.constant 0 : index
    %32 = vector.load %arg6[%c0_16, %c0_17, %c0_18] : memref<1x1x96xf32, #tpu.memory_space<vmem>>, vector<1x1x96xf32>
    %33 = vector.shape_cast %32 : vector<1x1x96xf32> to vector<1x96xf32>
    %34 = vector.broadcast %33 : vector<1x96xf32> to vector<8x96xf32>
    %35 = arith.addf %31, %34 : vector<8x96xf32>
    %36 = vector.extract_strided_slice %35 {offsets = [0, 0], sizes = [8, 8], strides = [1, 1]} : vector<8x96xf32> to vector<8x8xf32>
    %37 = vector.extract_strided_slice %35 {offsets = [0, 8], sizes = [8, 8], strides = [1, 1]} : vector<8x96xf32> to vector<8x8xf32>
    %38 = vector.extract_strided_slice %35 {offsets = [0, 16], sizes = [8, 8], strides = [1, 1]} : vector<8x96xf32> to vector<8x8xf32>
    %39 = vector.extract_strided_slice %35 {offsets = [0, 24], sizes = [8, 8], strides = [1, 1]} : vector<8x96xf32> to vector<8x8xf32>
    %40 = vector.shape_cast %36 : vector<8x8xf32> to vector<1x8x8xf32>
    %41 = vector.shape_cast %37 : vector<8x8xf32> to vector<1x8x8xf32>
    %42 = vector.shape_cast %38 : vector<8x8xf32> to vector<1x8x8xf32>
    %43 = vector.shape_cast %39 : vector<8x8xf32> to vector<1x8x8xf32>
    %44 = tpu.concatenate %40, %41, %42, %43 in 0 : vector<1x8x8xf32>, vector<1x8x8xf32>, vector<1x8x8xf32>, vector<1x8x8xf32> -> vector<4x8x8xf32>
    %45 = vector.extract_strided_slice %35 {offsets = [0, 32], sizes = [8, 8], strides = [1, 1]} : vector<8x96xf32> to vector<8x8xf32>
    %46 = vector.extract_strided_slice %35 {offsets = [0, 40], sizes = [8, 8], strides = [1, 1]} : vector<8x96xf32> to vector<8x8xf32>
    %47 = vector.extract_strided_slice %35 {offsets = [0, 48], sizes = [8, 8], strides = [1, 1]} : vector<8x96xf32> to vector<8x8xf32>
    %48 = vector.extract_strided_slice %35 {offsets = [0, 56], sizes = [8, 8], strides = [1, 1]} : vector<8x96xf32> to vector<8x8xf32>
    %49 = vector.shape_cast %45 : vector<8x8xf32> to vector<1x8x8xf32>
    %50 = vector.shape_cast %46 : vector<8x8xf32> to vector<1x8x8xf32>
    %51 = vector.shape_cast %47 : vector<8x8xf32> to vector<1x8x8xf32>
    %52 = vector.shape_cast %48 : vector<8x8xf32> to vector<1x8x8xf32>
    %53 = tpu.concatenate %49, %50, %51, %52 in 0 : vector<1x8x8xf32>, vector<1x8x8xf32>, vector<1x8x8xf32>, vector<1x8x8xf32> -> vector<4x8x8xf32>
    %54 = vector.extract_strided_slice %35 {offsets = [0, 64], sizes = [8, 8], strides = [1, 1]} : vector<8x96xf32> to vector<8x8xf32>
    %55 = vector.extract_strided_slice %35 {offsets = [0, 72], sizes = [8, 8], strides = [1, 1]} : vector<8x96xf32> to vector<8x8xf32>
    %56 = vector.extract_strided_slice %35 {offsets = [0, 80], sizes = [8, 8], strides = [1, 1]} : vector<8x96xf32> to vector<8x8xf32>
    %57 = vector.extract_strided_slice %35 {offsets = [0, 88], sizes = [8, 8], strides = [1, 1]} : vector<8x96xf32> to vector<8x8xf32>
    %58 = vector.shape_cast %54 : vector<8x8xf32> to vector<1x8x8xf32>
    %59 = vector.shape_cast %55 : vector<8x8xf32> to vector<1x8x8xf32>
    %60 = vector.shape_cast %56 : vector<8x8xf32> to vector<1x8x8xf32>
    %61 = vector.shape_cast %57 : vector<8x8xf32> to vector<1x8x8xf32>
    %62 = tpu.concatenate %58, %59, %60, %61 in 0 : vector<1x8x8xf32>, vector<1x8x8xf32>, vector<1x8x8xf32>, vector<1x8x8xf32> -> vector<4x8x8xf32>
    %63 = arith.truncf %44 : vector<4x8x8xf32> to vector<4x8x8xbf16>
    %64 = arith.truncf %53 : vector<4x8x8xf32> to vector<4x8x8xbf16>
    %cst_19 = arith.constant dense<0.000000e+00> : vector<4x8x8xf32>
    %65 = tpu.matmul %63, %64, %cst_19 {dimension_numbers = #tpu.dot_dimension_numbers<[2], [2], [1], [1], [0, 0, 0, 1, 1, 1], [0], [0]>} : vector<4x8x8xbf16>, vector<4x8x8xbf16>, vector<4x8x8xf32> -> vector<4x8x8xf32>
    %cst_20 = arith.constant dense<0xFF800000> : vector<4x8xf32>
    %66 = vector.multi_reduction <maximumf>, %65, %cst_20 [2] : vector<4x8x8xf32> to vector<4x8xf32>
    %67 = vector.shape_cast %66 : vector<4x8xf32> to vector<4x8x1xf32>
    %68 = vector.broadcast %67 : vector<4x8x1xf32> to vector<4x8x8xf32>
    %69 = arith.subf %65, %68 : vector<4x8x8xf32>
    %70 = math.exp %69 : vector<4x8x8xf32>
    %cst_21 = arith.constant dense<0.000000e+00> : vector<4x8xf32>
    %71 = vector.multi_reduction <add>, %70, %cst_21 [2] : vector<4x8x8xf32> to vector<4x8xf32>
    %72 = vector.shape_cast %71 : vector<4x8xf32> to vector<4x8x1xf32>
    %73 = tpu.reciprocal %72 {approx = true} : vector<4x8x1xf32> -> vector<4x8x1xf32>
    %74 = vector.broadcast %73 : vector<4x8x1xf32> to vector<4x8x8xf32>
    %75 = arith.mulf %70, %74 : vector<4x8x8xf32>
    %76 = arith.truncf %75 : vector<4x8x8xf32> to vector<4x8x8xbf16>
    %77 = arith.truncf %62 : vector<4x8x8xf32> to vector<4x8x8xbf16>
    %cst_22 = arith.constant dense<0.000000e+00> : vector<4x8x8xf32>
    %78 = tpu.matmul %76, %77, %cst_22 {dimension_numbers = #tpu.dot_dimension_numbers<[2], [1], [1], [2], [0, 0, 0, 1, 1, 2], [0], [0]>} : vector<4x8x8xbf16>, vector<4x8x8xbf16>, vector<4x8x8xf32> -> vector<4x8x8xf32>
    %79 = arith.truncf %78 : vector<4x8x8xf32> to vector<4x8x8xbf16>
    %c0_23 = arith.constant 0 : index
    %c0_24 = arith.constant 0 : index
    %c0_25 = arith.constant 0 : index
    %c0_26 = arith.constant 0 : index
    %80 = vector.load %arg7[%c0_23, %c0_24, %c0_25, %c0_26] : memref<1x4x8x32xbf16, #tpu.memory_space<vmem>>, vector<1x4x8x32xbf16>
    %81 = vector.shape_cast %80 : vector<1x4x8x32xbf16> to vector<4x8x32xbf16>
    %cst_27 = arith.constant dense<0.000000e+00> : vector<4x8x32xf32>
    %82 = tpu.matmul %79, %81, %cst_27 {dimension_numbers = #tpu.dot_dimension_numbers<[2], [1], [1], [2], [0, 0, 0, 1, 1, 2], [0], [0]>} : vector<4x8x8xbf16>, vector<4x8x32xbf16>, vector<4x8x32xf32> -> vector<4x8x32xf32>
    %83 = vector.extract_strided_slice %82 {offsets = [0, 0, 0], sizes = [1, 8, 32], strides = [1, 1, 1]} : vector<4x8x32xf32> to vector<1x8x32xf32>
    %84 = vector.shape_cast %83 : vector<1x8x32xf32> to vector<8x32xf32>
    %85 = vector.extract_strided_slice %82 {offsets = [1, 0, 0], sizes = [1, 8, 32], strides = [1, 1, 1]} : vector<4x8x32xf32> to vector<1x8x32xf32>
    %86 = vector.shape_cast %85 : vector<1x8x32xf32> to vector<8x32xf32>
    %87 = arith.addf %84, %86 : vector<8x32xf32>
    %88 = vector.extract_strided_slice %82 {offsets = [2, 0, 0], sizes = [1, 8, 32], strides = [1, 1, 1]} : vector<4x8x32xf32> to vector<1x8x32xf32>
    %89 = vector.shape_cast %88 : vector<1x8x32xf32> to vector<8x32xf32>
    %90 = arith.addf %87, %89 : vector<8x32xf32>
    %91 = vector.extract_strided_slice %82 {offsets = [3, 0, 0], sizes = [1, 8, 32], strides = [1, 1, 1]} : vector<4x8x32xf32> to vector<1x8x32xf32>
    %92 = vector.shape_cast %91 : vector<1x8x32xf32> to vector<8x32xf32>
    %93 = arith.addf %90, %92 : vector<8x32xf32>
    %c0_28 = arith.constant 0 : index
    %c0_29 = arith.constant 0 : index
    %c0_30 = arith.constant 0 : index
    %94 = vector.load %arg8[%c0_28, %c0_29, %c0_30] : memref<1x1x32xf32, #tpu.memory_space<vmem>>, vector<1x1x32xf32>
    %95 = vector.shape_cast %94 : vector<1x1x32xf32> to vector<1x32xf32>
    %96 = vector.broadcast %95 : vector<1x32xf32> to vector<8x32xf32>
    %97 = arith.addf %93, %96 : vector<8x32xf32>
    %98 = arith.addf %3, %97 : vector<8x32xf32>
    %cst_31 = arith.constant dense<0.000000e+00> : vector<8xf32>
    %99 = vector.multi_reduction <add>, %98, %cst_31 [1] : vector<8x32xf32> to vector<8xf32>
    %100 = vector.shape_cast %99 : vector<8xf32> to vector<8x1xf32>
    %cst_32 = arith.constant 3.200000e+01 : f32
    %101 = vector.broadcast %cst_32 : f32 to vector<8x1xf32>
    %102 = arith.divf %100, %101 : vector<8x1xf32>
    %103 = vector.broadcast %102 : vector<8x1xf32> to vector<8x32xf32>
    %104 = arith.subf %98, %103 : vector<8x32xf32>
    %105 = arith.mulf %104, %104 : vector<8x32xf32>
    %cst_33 = arith.constant dense<0.000000e+00> : vector<8xf32>
    %106 = vector.multi_reduction <add>, %105, %cst_33 [1] : vector<8x32xf32> to vector<8xf32>
    %107 = vector.shape_cast %106 : vector<8xf32> to vector<8x1xf32>
    %cst_34 = arith.constant 3.200000e+01 : f32
    %108 = vector.broadcast %cst_34 : f32 to vector<8x1xf32>
    %109 = arith.divf %107, %108 : vector<8x1xf32>
    %cst_35 = arith.constant 9.99999974E-6 : f32
    %110 = vector.broadcast %cst_35 : f32 to vector<8x1xf32>
    %111 = arith.addf %109, %110 : vector<8x1xf32>
    %112 = math.rsqrt %111 : vector<8x1xf32>
    %113 = vector.broadcast %112 : vector<8x1xf32> to vector<8x32xf32>
    %114 = arith.mulf %104, %113 : vector<8x32xf32>
    %c0_36 = arith.constant 0 : index
    %c0_37 = arith.constant 0 : index
    %c0_38 = arith.constant 0 : index
    %115 = vector.load %arg9[%c0_36, %c0_37, %c0_38] : memref<1x1x32xf32, #tpu.memory_space<vmem>>, vector<1x1x32xf32>
    %116 = vector.shape_cast %115 : vector<1x1x32xf32> to vector<1x32xf32>
    %117 = vector.broadcast %116 : vector<1x32xf32> to vector<8x32xf32>
    %118 = arith.mulf %114, %117 : vector<8x32xf32>
    %c0_39 = arith.constant 0 : index
    %c0_40 = arith.constant 0 : index
    %c0_41 = arith.constant 0 : index
    %119 = vector.load %arg10[%c0_39, %c0_40, %c0_41] : memref<1x1x32xf32, #tpu.memory_space<vmem>>, vector<1x1x32xf32>
    %120 = vector.shape_cast %119 : vector<1x1x32xf32> to vector<1x32xf32>
    %121 = vector.broadcast %120 : vector<1x32xf32> to vector<8x32xf32>
    %122 = arith.addf %118, %121 : vector<8x32xf32>
    %123 = arith.truncf %122 : vector<8x32xf32> to vector<8x32xbf16>
    %c0_42 = arith.constant 0 : index
    %c0_43 = arith.constant 0 : index
    %c0_44 = arith.constant 0 : index
    %124 = vector.load %arg11[%c0_42, %c0_43, %c0_44] : memref<1x32x128xbf16, #tpu.memory_space<vmem>>, vector<1x32x128xbf16>
    %125 = vector.shape_cast %124 : vector<1x32x128xbf16> to vector<32x128xbf16>
    %cst_45 = arith.constant dense<0.000000e+00> : vector<8x128xf32>
    %126 = tpu.matmul %123, %125, %cst_45 {dimension_numbers = #tpu.dot_dimension_numbers<[1], [0], [0], [1], [0, 0, 1, 1], [], []>} : vector<8x32xbf16>, vector<32x128xbf16>, vector<8x128xf32> -> vector<8x128xf32>
    %c0_46 = arith.constant 0 : index
    %c0_47 = arith.constant 0 : index
    %c0_48 = arith.constant 0 : index
    %127 = vector.load %arg12[%c0_46, %c0_47, %c0_48] : memref<1x1x128xf32, #tpu.memory_space<vmem>>, vector<1x1x128xf32>
    %128 = vector.shape_cast %127 : vector<1x1x128xf32> to vector<1x128xf32>
    %129 = vector.broadcast %128 : vector<1x128xf32> to vector<8x128xf32>
    %130 = arith.addf %126, %129 : vector<8x128xf32>
    %cst_49 = arith.constant 1.702000e+00 : f32
    %131 = vector.broadcast %cst_49 : f32 to vector<8x128xf32>
    %132 = arith.mulf %131, %130 : vector<8x128xf32>
    %133 = arith.negf %132 : vector<8x128xf32>
    %134 = math.exp %133 : vector<8x128xf32>
    %cst_50 = arith.constant 1.000000e+00 : f32
    %135 = vector.broadcast %cst_50 : f32 to vector<8x128xf32>
    %136 = arith.addf %135, %134 : vector<8x128xf32>
    %137 = arith.divf %135, %136 : vector<8x128xf32>
    %138 = arith.mulf %130, %137 : vector<8x128xf32>
    %139 = arith.truncf %138 : vector<8x128xf32> to vector<8x128xbf16>
    %c0_51 = arith.constant 0 : index
    %c0_52 = arith.constant 0 : index
    %c0_53 = arith.constant 0 : index
    %140 = vector.load %arg13[%c0_51, %c0_52, %c0_53] : memref<1x128x32xbf16, #tpu.memory_space<vmem>>, vector<1x128x32xbf16>
    %141 = vector.shape_cast %140 : vector<1x128x32xbf16> to vector<128x32xbf16>
    %cst_54 = arith.constant dense<0.000000e+00> : vector<8x32xf32>
    %142 = tpu.matmul %139, %141, %cst_54 {dimension_numbers = #tpu.dot_dimension_numbers<[1], [0], [0], [1], [0, 0, 1, 1], [], []>} : vector<8x128xbf16>, vector<128x32xbf16>, vector<8x32xf32> -> vector<8x32xf32>
    %c0_55 = arith.constant 0 : index
    %c0_56 = arith.constant 0 : index
    %c0_57 = arith.constant 0 : index
    %143 = vector.load %arg14[%c0_55, %c0_56, %c0_57] : memref<1x1x32xf32, #tpu.memory_space<vmem>>, vector<1x1x32xf32>
    %144 = vector.shape_cast %143 : vector<1x1x32xf32> to vector<1x32xf32>
    %145 = vector.broadcast %144 : vector<1x32xf32> to vector<8x32xf32>
    %146 = arith.addf %142, %145 : vector<8x32xf32>
    %147 = arith.addf %98, %146 : vector<8x32xf32>
    %c0_58 = arith.constant 0 : index
    %c0_59 = arith.constant 0 : index
    %148 = vector.load %arg16[%c0_58, %c0_59] : memref<8x32xf32, #tpu.memory_space<vmem>>, vector<8x32xf32>
    tpu.vector_store %arg16[%c0_58, %c0_59], %147 {strides = array<i32>} : memref<8x32xf32, #tpu.memory_space<vmem>>, vector<8x32xf32>,
    %c1_i32 = arith.constant 1 : i32
    %149 = arith.cmpi eq, %arg1, %c1_i32 : i32
    %150 = arith.extui %149 : i1 to i32
    %c0_i32_60 = arith.constant 0 : i32
    %151 = arith.cmpi ne, %150, %c0_i32_60 : i32
    scf.if %151 {
      %c0_61 = arith.constant 0 : index
      %c0_62 = arith.constant 0 : index
      %c0_63 = arith.constant 0 : index
      %152 = vector.load %arg15[%c0_61, %c0_62, %c0_63] : memref<1x8x32xf32, #tpu.memory_space<vmem>>, vector<1x8x32xf32>
      %153 = vector.shape_cast %152 : vector<1x8x32xf32> to vector<8x32xf32>
      %154 = vector.shape_cast %147 : vector<8x32xf32> to vector<1x8x32xf32>
      tpu.vector_store %arg15[%c0_61, %c0_62, %c0_63], %154 {strides = array<i32>} : memref<1x8x32xf32, #tpu.memory_space<vmem>>, vector<1x8x32xf32>,
    } else {
    }
    return
  }
  func.func @transform_0(%arg0: i32, %arg1: i32) -> (i32, i32, i32) {
    %c0_i32 = arith.constant 0 : i32
    %c0_i32_0 = arith.constant 0 : i32
    %c0_i32_1 = arith.constant 0 : i32
    return %arg0, %c0_i32, %c0_i32_0 : i32, i32, i32
  }
  func.func @transform_1(%arg0: i32, %arg1: i32) -> (i32, i32, i32) {
    %c0_i32 = arith.constant 0 : i32
    %c0_i32_0 = arith.constant 0 : i32
    %c0_i32_1 = arith.constant 0 : i32
    return %arg1, %c0_i32, %c0_i32_0 : i32, i32, i32
  }
  func.func @transform_2(%arg0: i32, %arg1: i32) -> (i32, i32, i32) {
    %c0_i32 = arith.constant 0 : i32
    %c0_i32_0 = arith.constant 0 : i32
    %c0_i32_1 = arith.constant 0 : i32
    return %arg1, %c0_i32, %c0_i32_0 : i32, i32, i32
  }
  func.func @transform_3(%arg0: i32, %arg1: i32) -> (i32, i32, i32) {
    %c0_i32 = arith.constant 0 : i32
    %c0_i32_0 = arith.constant 0 : i32
    %c0_i32_1 = arith.constant 0 : i32
    return %arg1, %c0_i32, %c0_i32_0 : i32, i32, i32
  }
  func.func @transform_4(%arg0: i32, %arg1: i32) -> (i32, i32, i32) {
    %c0_i32 = arith.constant 0 : i32
    %c0_i32_0 = arith.constant 0 : i32
    %c0_i32_1 = arith.constant 0 : i32
    return %arg1, %c0_i32, %c0_i32_0 : i32, i32, i32
  }
  func.func @transform_5(%arg0: i32, %arg1: i32) -> (i32, i32, i32, i32) {
    %c0_i32 = arith.constant 0 : i32
    %c0_i32_0 = arith.constant 0 : i32
    %c0_i32_1 = arith.constant 0 : i32
    %c0_i32_2 = arith.constant 0 : i32
    return %arg1, %c0_i32, %c0_i32_0, %c0_i32_1 : i32, i32, i32, i32
  }
  func.func @transform_6(%arg0: i32, %arg1: i32) -> (i32, i32, i32) {
    %c0_i32 = arith.constant 0 : i32
    %c0_i32_0 = arith.constant 0 : i32
    %c0_i32_1 = arith.constant 0 : i32
    return %arg1, %c0_i32, %c0_i32_0 : i32, i32, i32
  }
  func.func @transform_7(%arg0: i32, %arg1: i32) -> (i32, i32, i32) {
    %c0_i32 = arith.constant 0 : i32
    %c0_i32_0 = arith.constant 0 : i32
    %c0_i32_1 = arith.constant 0 : i32
    return %arg1, %c0_i32, %c0_i32_0 : i32, i32, i32
  }
  func.func @transform_8(%arg0: i32, %arg1: i32) -> (i32, i32, i32) {
    %c0_i32 = arith.constant 0 : i32
    %c0_i32_0 = arith.constant 0 : i32
    %c0_i32_1 = arith.constant 0 : i32
    return %arg1, %c0_i32, %c0_i32_0 : i32, i32, i32
  }
  func.func @transform_9(%arg0: i32, %arg1: i32) -> (i32, i32, i32) {
    %c0_i32 = arith.constant 0 : i32
    %c0_i32_0 = arith.constant 0 : i32
    %c0_i32_1 = arith.constant 0 : i32
    return %arg1, %c0_i32, %c0_i32_0 : i32, i32, i32
  }
  func.func @transform_10(%arg0: i32, %arg1: i32) -> (i32, i32, i32) {
    %c0_i32 = arith.constant 0 : i32
    %c0_i32_0 = arith.constant 0 : i32
    %c0_i32_1 = arith.constant 0 : i32
    return %arg1, %c0_i32, %c0_i32_0 : i32, i32, i32
  }
  func.func @transform_11(%arg0: i32, %arg1: i32) -> (i32, i32, i32) {
    %c0_i32 = arith.constant 0 : i32
    %c0_i32_0 = arith.constant 0 : i32
    %c0_i32_1 = arith.constant 0 : i32
    return %arg1, %c0_i32, %c0_i32_0 : i32, i32, i32
  }
  func.func @transform_12(%arg0: i32, %arg1: i32) -> (i32, i32, i32) {
    %c0_i32 = arith.constant 0 : i32
    %c0_i32_0 = arith.constant 0 : i32
    %c0_i32_1 = arith.constant 0 : i32
    return %arg1, %c0_i32, %c0_i32_0 : i32, i32, i32
  }
  func.func @transform_13(%arg0: i32, %arg1: i32) -> (i32, i32, i32) {
    %c0_i32 = arith.constant 0 : i32
    %c0_i32_0 = arith.constant 0 : i32
    %c0_i32_1 = arith.constant 0 : i32
    return %arg0, %c0_i32, %c0_i32_0 : i32, i32, i32
  }
}

</mosaic_0001>

<llo_original>
// kernel: tpu_custom_call.1
$region0: #{tpu_custom_call.1}
  #allocation0 [shape = 'u32[]', space=smem, size = 0x4, offset = 0x4, fixed_abs, tag = 'smem constant byte address 0x4 - core index']
  #allocation1 [shape = 'u32[144,128]{1,0:T(1,128)}', space=vmem, size = 0x12000, scoped, tag = 'internal scratch']
  #allocation2 [shape = 'f32[8,32]{1,0:T(8,128)}', space=vmem, size = 0x1000, scoped, tag = 'scratch operand']
  %s0 = inlined_call_operand.vmem [shape: f32[2,8,32], index: 0, kind: input, shape index: {}]
  %s1 = inlined_call_operand.vmem [shape: f32[2,1,32], index: 1, kind: input, shape index: {}]
  %s2 = inlined_call_operand.vmem [shape: f32[2,1,32], index: 2, kind: input, shape index: {}]
  %s3 = inlined_call_operand.vmem [shape: bf16[2,32,96], index: 3, kind: input, shape index: {}]
  %s4 = inlined_call_operand.vmem [shape: f32[2,1,96], index: 4, kind: input, shape index: {}]
  %s5 = inlined_call_operand.vmem [shape: bf16[2,4,8,32], index: 5, kind: input, shape index: {}]
  %s6 = inlined_call_operand.vmem [shape: f32[2,1,32], index: 6, kind: input, shape index: {}]
  %s7 = inlined_call_operand.vmem [shape: f32[2,1,32], index: 7, kind: input, shape index: {}]
  %s8 = inlined_call_operand.vmem [shape: f32[2,1,32], index: 8, kind: input, shape index: {}]
  %s9 = inlined_call_operand.vmem [shape: bf16[2,32,128], index: 9, kind: input, shape index: {}]
  %s10 = inlined_call_operand.vmem [shape: f32[2,1,128], index: 10, kind: input, shape index: {}]
  %s11 = inlined_call_operand.vmem [shape: bf16[2,128,32], index: 11, kind: input, shape index: {}]
  %s12 = inlined_call_operand.vmem [shape: f32[2,1,32], index: 12, kind: input, shape index: {}]
  %s13 = inlined_call_operand.hbm [shape: f32[2,8,32], index: 13, kind: output, shape index: {}]
  %s14 = sld [smem:[#allocation0]]
  $region93: #{tpu_custom_call.1} parent=0
    _
  %s16 = ssub.s32 1, %s14
  %s17 = scalar_select 0, %s16, %s14
  $region1: #{tpu_custom_call.1} parent=0
    #allocation3 [shape = 'u8[8192]{0}', space=vmem, size = 0x2000, scoped, tag = 'output window, operand 0']
    #allocation4 [shape = 's32[2]{0}', space=sflag, size = 0x8, scoped, tag = 'scoped memory for tpu_custom_call.1']
    %18 = vsyncpa [#allocation4], 0
    %s19 = scalar_lea.sflag [#allocation4], 1
    %20 = vsyncpa %s19, 0
    loop: start=0, step=1, limit=6
    $region2: #{tpu_custom_call.1} parent=1 // loop_pre_header
      _
    $region3: #{tpu_custom_call.1} parent=1 // loop_header
      %s22 = sphi 0, %s26
      %p23 = scmp.ge.s32.totalorder %s22, 6
      %s29 = sphi 0, %s41
      %s30 = sphi 0, %s37
      %s31 = sphi 0, %s29
      %s32 = sphi 0, %s30
      %s33 = sphi 0, %s31
      %s34 = sphi 0, %s32
      %s44 = sphi 0, %s46
      %s47 = sphi 0, %s44
      %s48 = sphi 0, %s47
      %s64 = sphi 0, %s48
      %s70 = sphi 0, %s72
      %s73 = sphi 0, %s70
      %s74 = sphi 0, %s73
      %s90 = sphi 0, %s74
      %s96 = sphi 0, %s98
      %s99 = sphi 0, %s96
      %s100 = sphi 0, %s99
      %s116 = sphi 0, %s100
      %s122 = sphi 0, %s124
      %s125 = sphi 0, %s122
      %s126 = sphi 0, %s125
      %s142 = sphi 0, %s126
      %s148 = sphi 0, %s150
      %s151 = sphi 0, %s148
      %s152 = sphi 0, %s151
      %s168 = sphi 0, %s152
      %s174 = sphi 0, %s176
      %s177 = sphi 0, %s174
      %s178 = sphi 0, %s177
      %s194 = sphi 0, %s178
      %s200 = sphi 0, %s202
      %s203 = sphi 0, %s200
      %s204 = sphi 0, %s203
      %s220 = sphi 0, %s204
      %s226 = sphi 0, %s228
      %s229 = sphi 0, %s226
      %s230 = sphi 0, %s229
      %s246 = sphi 0, %s230
      %s252 = sphi 0, %s254
      %s255 = sphi 0, %s252
      %s256 = sphi 0, %s255
      %s272 = sphi 0, %s256
      %s278 = sphi 0, %s280
      %s281 = sphi 0, %s278
      %s282 = sphi 0, %s281
      %s298 = sphi 0, %s282
      %s304 = sphi 0, %s306
      %s307 = sphi 0, %s304
      %s308 = sphi 0, %s307
      %s324 = sphi 0, %s308
      %s330 = sphi 0, %s332
      %s333 = sphi 0, %s330
      %s334 = sphi 0, %s333
      %s350 = sphi 0, %s334
      %s356 = sphi 0, %s358
      %s359 = sphi 0, %s356
      %s360 = sphi 0, %s359
      %s376 = sphi 0, %s360
      %s382 = sphi 0, %s384
      %s385 = sphi 0, %s382
      %s386 = sphi 0, %s385
      %s402 = sphi 0, %s386
    $region4: #{tpu_custom_call.1} parent=1 // loop_header_branch
      %25 = sbr.rel (%p23) target = $region8
    $region5: #{tpu_custom_call.1} parent=1 // loop_body
      %s27 = ssub.s32 %s22, 1
      %s28 = ssub.s32 %s22, 2
      %s35 = sadd.s32 1, %s30
      %p36 = scmp.ge.s32.totalorder %s35, 2
      %s37 = scalar_select %p36, 0, %s35
      %s38 = sadd.s32 1, %s29
      %s39 = scalar_select %p36, %s38, %s29
      %p40 = scmp.ge.s32.totalorder %s39, 2
      %s41 = scalar_select %p40, 0, %s39
      %s42 = ssub.s32 %s29, %s41
      %p43 = scmp.eq.s32.totalorder %s42, 0
      %s45 = sadd.s32 %s44, 1
      %s46 = scalar_select %p43, %s44, %s45
      %p49 = pneg %p43
      %p50 = scmp.eq.s32.totalorder %s22, 3
      %p51 = por %p49, %p50
      %p52 = scmp.ne.s32.totalorder %s44, %s47
      %p53 = scmp.eq.s32.totalorder %s22, 0
      %p54 = por %p52, %p53
      %p55 = scmp.ne.s32.totalorder %s44, %s47
      %p56 = scmp.eq.s32.totalorder %s27, 3
      %p57 = por %p55, %p56
      %p58 = scmp.ne.s32.totalorder %s47, %s48
      %p59 = scmp.eq.s32.totalorder %s27, 0
      %p60 = por %p58, %p59
      %p61 = scmp.ne.s32.totalorder %s47, %s48
      %p62 = scmp.eq.s32.totalorder %s28, 3
      %p63 = por %p61, %p62
      %p65 = scmp.ne.s32.totalorder %s48, %s64
      %p66 = scmp.eq.s32.totalorder %s28, 0
      %p67 = por %p65, %p66
      %s68 = ssub.s32 %s30, %s37
      %p69 = scmp.eq.s32.totalorder %s68, 0
      %s71 = sadd.s32 %s70, 1
      %s72 = scalar_select %p69, %s70, %s71
      %p75 = pneg %p69
      %p76 = scmp.eq.s32.totalorder %s22, 3
      %p77 = por %p75, %p76
      %p78 = scmp.ne.s32.totalorder %s70, %s73
      %p79 = scmp.eq.s32.totalorder %s22, 0
      %p80 = por %p78, %p79
      %p81 = scmp.ne.s32.totalorder %s70, %s73
      %p82 = scmp.eq.s32.totalorder %s27, 3
      %p83 = por %p81, %p82
      %p84 = scmp.ne.s32.totalorder %s73, %s74
      %p85 = scmp.eq.s32.totalorder %s27, 0
      %p86 = por %p84, %p85
      %p87 = scmp.ne.s32.totalorder %s73, %s74
      %p88 = scmp.eq.s32.totalorder %s28, 3
      %p89 = por %p87, %p88
      %p91 = scmp.ne.s32.totalorder %s74, %s90
      %p92 = scmp.eq.s32.totalorder %s28, 0
      %p93 = por %p91, %p92
      %s94 = ssub.s32 %s30, %s37
      %p95 = scmp.eq.s32.totalorder %s94, 0
      %s97 = sadd.s32 %s96, 1
      %s98 = scalar_select %p95, %s96, %s97
      %p101 = pneg %p95
      %p102 = scmp.eq.s32.totalorder %s22, 3
      %p103 = por %p101, %p102
      %p104 = scmp.ne.s32.totalorder %s96, %s99
      %p105 = scmp.eq.s32.totalorder %s22, 0
      %p106 = por %p104, %p105
      %p107 = scmp.ne.s32.totalorder %s96, %s99
      %p108 = scmp.eq.s32.totalorder %s27, 3
      %p109 = por %p107, %p108
      %p110 = scmp.ne.s32.totalorder %s99, %s100
      %p111 = scmp.eq.s32.totalorder %s27, 0
      %p112 = por %p110, %p111
      %p113 = scmp.ne.s32.totalorder %s99, %s100
      %p114 = scmp.eq.s32.totalorder %s28, 3
      %p115 = por %p113, %p114
      %p117 = scmp.ne.s32.totalorder %s100, %s116
      %p118 = scmp.eq.s32.totalorder %s28, 0
      %p119 = por %p117, %p118
      %s120 = ssub.s32 %s30, %s37
      %p121 = scmp.eq.s32.totalorder %s120, 0
      %s123 = sadd.s32 %s122, 1
      %s124 = scalar_select %p121, %s122, %s123
      %p127 = pneg %p121
      %p128 = scmp.eq.s32.totalorder %s22, 3
      %p129 = por %p127, %p128
      %p130 = scmp.ne.s32.totalorder %s122, %s125
      %p131 = scmp.eq.s32.totalorder %s22, 0
      %p132 = por %p130, %p131
      %p133 = scmp.ne.s32.totalorder %s122, %s125
      %p134 = scmp.eq.s32.totalorder %s27, 3
      %p135 = por %p133, %p134
      %p136 = scmp.ne.s32.totalorder %s125, %s126
      %p137 = scmp.eq.s32.totalorder %s27, 0
      %p138 = por %p136, %p137
      %p139 = scmp.ne.s32.totalorder %s125, %s126
      %p140 = scmp.eq.s32.totalorder %s28, 3
      %p141 = por %p139, %p140
      %p143 = scmp.ne.s32.totalorder %s126, %s142
      %p144 = scmp.eq.s32.totalorder %s28, 0
      %p145 = por %p143, %p144
      %s146 = ssub.s32 %s30, %s37
      %p147 = scmp.eq.s32.totalorder %s146, 0
      %s149 = sadd.s32 %s148, 1
      %s150 = scalar_select %p147, %s148, %s149
      %p153 = pneg %p147
      %p154 = scmp.eq.s32.totalorder %s22, 3
      %p155 = por %p153, %p154
      %p156 = scmp.ne.s32.totalorder %s148, %s151
      %p157 = scmp.eq.s32.totalorder %s22, 0
      %p158 = por %p156, %p157
      %p159 = scmp.ne.s32.totalorder %s148, %s151
      %p160 = scmp.eq.s32.totalorder %s27, 3
      %p161 = por %p159, %p160
      %p162 = scmp.ne.s32.totalorder %s151, %s152
      %p163 = scmp.eq.s32.totalorder %s27, 0
      %p164 = por %p162, %p163
      %p165 = scmp.ne.s32.totalorder %s151, %s152
      %p166 = scmp.eq.s32.totalorder %s28, 3
      %p167 = por %p165, %p166
      %p169 = scmp.ne.s32.totalorder %s152, %s168
      %p170 = scmp.eq.s32.totalorder %s28, 0
      %p171 = por %p169, %p170
      %s172 = ssub.s32 %s30, %s37
      %p173 = scmp.eq.s32.totalorder %s172, 0
      %s175 = sadd.s32 %s174, 1
      %s176 = scalar_select %p173, %s174, %s175
      %p179 = pneg %p173
      %p180 = scmp.eq.s32.totalorder %s22, 3
      %p181 = por %p179, %p180
      %p182 = scmp.ne.s32.totalorder %s174, %s177
      %p183 = scmp.eq.s32.totalorder %s22, 0
      %p184 = por %p182, %p183
      %p185 = scmp.ne.s32.totalorder %s174, %s177
      %p186 = scmp.eq.s32.totalorder %s27, 3
      %p187 = por %p185, %p186
      %p188 = scmp.ne.s32.totalorder %s177, %s178
      %p189 = scmp.eq.s32.totalorder %s27, 0
      %p190 = por %p188, %p189
      %p191 = scmp.ne.s32.totalorder %s177, %s178
      %p192 = scmp.eq.s32.totalorder %s28, 3
      %p193 = por %p191, %p192
      %p195 = scmp.ne.s32.totalorder %s178, %s194
      %p196 = scmp.eq.s32.totalorder %s28, 0
      %p197 = por %p195, %p196
      %s198 = ssub.s32 %s30, %s37
      %p199 = scmp.eq.s32.totalorder %s198, 0
      %s201 = sadd.s32 %s200, 1
      %s202 = scalar_select %p199, %s200, %s201
      %p205 = pneg %p199
      %p206 = scmp.eq.s32.totalorder %s22, 3
      %p207 = por %p205, %p206
      %p208 = scmp.ne.s32.totalorder %s200, %s203
      %p209 = scmp.eq.s32.totalorder %s22, 0
      %p210 = por %p208, %p209
      %p211 = scmp.ne.s32.totalorder %s200, %s203
      %p212 = scmp.eq.s32.totalorder %s27, 3
      %p213 = por %p211, %p212
      %p214 = scmp.ne.s32.totalorder %s203, %s204
      %p215 = scmp.eq.s32.totalorder %s27, 0
      %p216 = por %p214, %p215
      %p217 = scmp.ne.s32.totalorder %s203, %s204
      %p218 = scmp.eq.s32.totalorder %s28, 3
      %p219 = por %p217, %p218
      %p221 = scmp.ne.s32.totalorder %s204, %s220
      %p222 = scmp.eq.s32.totalorder %s28, 0
      %p223 = por %p221, %p222
      %s224 = ssub.s32 %s30, %s37
      %p225 = scmp.eq.s32.totalorder %s224, 0
      %s227 = sadd.s32 %s226, 1
      %s228 = scalar_select %p225, %s226, %s227
      %p231 = pneg %p225
      %p232 = scmp.eq.s32.totalorder %s22, 3
      %p233 = por %p231, %p232
      %p234 = scmp.ne.s32.totalorder %s226, %s229
      %p235 = scmp.eq.s32.totalorder %s22, 0
      %p236 = por %p234, %p235
      %p237 = scmp.ne.s32.totalorder %s226, %s229
      %p238 = scmp.eq.s32.totalorder %s27, 3
      %p239 = por %p237, %p238
      %p240 = scmp.ne.s32.totalorder %s229, %s230
      %p241 = scmp.eq.s32.totalorder %s27, 0
      %p242 = por %p240, %p241
      %p243 = scmp.ne.s32.totalorder %s229, %s230
      %p244 = scmp.eq.s32.totalorder %s28, 3
      %p245 = por %p243, %p244
      %p247 = scmp.ne.s32.totalorder %s230, %s246
      %p248 = scmp.eq.s32.totalorder %s28, 0
      %p249 = por %p247, %p248
      %s250 = ssub.s32 %s30, %s37
      %p251 = scmp.eq.s32.totalorder %s250, 0
      %s253 = sadd.s32 %s252, 1
      %s254 = scalar_select %p251, %s252, %s253
      %p257 = pneg %p251
      %p258 = scmp.eq.s32.totalorder %s22, 3
      %p259 = por %p257, %p258
      %p260 = scmp.ne.s32.totalorder %s252, %s255
      %p261 = scmp.eq.s32.totalorder %s22, 0
      %p262 = por %p260, %p261
      %p263 = scmp.ne.s32.totalorder %s252, %s255
      %p264 = scmp.eq.s32.totalorder %s27, 3
      %p265 = por %p263, %p264
      %p266 = scmp.ne.s32.totalorder %s255, %s256
      %p267 = scmp.eq.s32.totalorder %s27, 0
      %p268 = por %p266, %p267
      %p269 = scmp.ne.s32.totalorder %s255, %s256
      %p270 = scmp.eq.s32.totalorder %s28, 3
      %p271 = por %p269, %p270
      %p273 = scmp.ne.s32.totalorder %s256, %s272
      %p274 = scmp.eq.s32.totalorder %s28, 0
      %p275 = por %p273, %p274
      %s276 = ssub.s32 %s30, %s37
      %p277 = scmp.eq.s32.totalorder %s276, 0
      %s279 = sadd.s32 %s278, 1
      %s280 = scalar_select %p277, %s278, %s279
      %p283 = pneg %p277
      %p284 = scmp.eq.s32.totalorder %s22, 3
      %p285 = por %p283, %p284
      %p286 = scmp.ne.s32.totalorder %s278, %s281
      %p287 = scmp.eq.s32.totalorder %s22, 0
      %p288 = por %p286, %p287
      %p289 = scmp.ne.s32.totalorder %s278, %s281
      %p290 = scmp.eq.s32.totalorder %s27, 3
      %p291 = por %p289, %p290
      %p292 = scmp.ne.s32.totalorder %s281, %s282
      %p293 = scmp.eq.s32.totalorder %s27, 0
      %p294 = por %p292, %p293
      %p295 = scmp.ne.s32.totalorder %s281, %s282
      %p296 = scmp.eq.s32.totalorder %s28, 3
      %p297 = por %p295, %p296
      %p299 = scmp.ne.s32.totalorder %s282, %s298
      %p300 = scmp.eq.s32.totalorder %s28, 0
      %p301 = por %p299, %p300
      %s302 = ssub.s32 %s30, %s37
      %p303 = scmp.eq.s32.totalorder %s302, 0
      %s305 = sadd.s32 %s304, 1
      %s306 = scalar_select %p303, %s304, %s305
      %p309 = pneg %p303
      %p310 = scmp.eq.s32.totalorder %s22, 3
      %p311 = por %p309, %p310
      %p312 = scmp.ne.s32.totalorder %s304, %s307
      %p313 = scmp.eq.s32.totalorder %s22, 0
      %p314 = por %p312, %p313
      %p315 = scmp.ne.s32.totalorder %s304, %s307
      %p316 = scmp.eq.s32.totalorder %s27, 3
      %p317 = por %p315, %p316
      %p318 = scmp.ne.s32.totalorder %s307, %s308
      %p319 = scmp.eq.s32.totalorder %s27, 0
      %p320 = por %p318, %p319
      %p321 = scmp.ne.s32.totalorder %s307, %s308
      %p322 = scmp.eq.s32.totalorder %s28, 3
      %p323 = por %p321, %p322
      %p325 = scmp.ne.s32.totalorder %s308, %s324
      %p326 = scmp.eq.s32.totalorder %s28, 0
      %p327 = por %p325, %p326
      %s328 = ssub.s32 %s30, %s37
      %p329 = scmp.eq.s32.totalorder %s328, 0
      %s331 = sadd.s32 %s330, 1
      %s332 = scalar_select %p329, %s330, %s331
      %p335 = pneg %p329
      %p336 = scmp.eq.s32.totalorder %s22, 3
      %p337 = por %p335, %p336
      %p338 = scmp.ne.s32.totalorder %s330, %s333
      %p339 = scmp.eq.s32.totalorder %s22, 0
      %p340 = por %p338, %p339
      %p341 = scmp.ne.s32.totalorder %s330, %s333
      %p342 = scmp.eq.s32.totalorder %s27, 3
      %p343 = por %p341, %p342
      %p344 = scmp.ne.s32.totalorder %s333, %s334
      %p345 = scmp.eq.s32.totalorder %s27, 0
      %p346 = por %p344, %p345
      %p347 = scmp.ne.s32.totalorder %s333, %s334
      %p348 = scmp.eq.s32.totalorder %s28, 3
      %p349 = por %p347, %p348
      %p351 = scmp.ne.s32.totalorder %s334, %s350
      %p352 = scmp.eq.s32.totalorder %s28, 0
      %p353 = por %p351, %p352
      %s354 = ssub.s32 %s30, %s37
      %p355 = scmp.eq.s32.totalorder %s354, 0
      %s357 = sadd.s32 %s356, 1
      %s358 = scalar_select %p355, %s356, %s357
      %p361 = pneg %p355
      %p362 = scmp.eq.s32.totalorder %s22, 3
      %p363 = por %p361, %p362
      %p364 = scmp.ne.s32.totalorder %s356, %s359
      %p365 = scmp.eq.s32.totalorder %s22, 0
      %p366 = por %p364, %p365
      %p367 = scmp.ne.s32.totalorder %s356, %s359
      %p368 = scmp.eq.s32.totalorder %s27, 3
      %p369 = por %p367, %p368
      %p370 = scmp.ne.s32.totalorder %s359, %s360
      %p371 = scmp.eq.s32.totalorder %s27, 0
      %p372 = por %p370, %p371
      %p373 = scmp.ne.s32.totalorder %s359, %s360
      %p374 = scmp.eq.s32.totalorder %s28, 3
      %p375 = por %p373, %p374
      %p377 = scmp.ne.s32.totalorder %s360, %s376
      %p378 = scmp.eq.s32.totalorder %s28, 0
      %p379 = por %p377, %p378
      %s380 = ssub.s32 %s29, %s41
      %p381 = scmp.eq.s32.totalorder %s380, 0
      %s383 = sadd.s32 %s382, 1
      %s384 = scalar_select %p381, %s382, %s383
      %p387 = pneg %p381
      %p388 = scmp.eq.s32.totalorder %s22, 3
      %p389 = por %p387, %p388
      %p390 = scmp.ne.s32.totalorder %s382, %s385
      %p391 = scmp.eq.s32.totalorder %s22, 0
      %p392 = por %p390, %p391
      %p393 = scmp.ne.s32.totalorder %s382, %s385
      %p394 = scmp.eq.s32.totalorder %s27, 3
      %p395 = por %p393, %p394
      %p396 = scmp.ne.s32.totalorder %s385, %s386
      %p397 = scmp.eq.s32.totalorder %s27, 0
      %p398 = por %p396, %p397
      %p399 = scmp.ne.s32.totalorder %s385, %s386
      %p400 = scmp.eq.s32.totalorder %s28, 3
      %p401 = por %p399, %p400
      %p403 = scmp.ne.s32.totalorder %s386, %s402
      %p404 = scmp.eq.s32.totalorder %s28, 0
      %p405 = por %p403, %p404
      %p406 = scmp.le.s32.totalorder 1, %s22
      %p407 = scmp.lt.s32.totalorder %s22, 5
      %p408 = pnand %p406, %p407
      %p409 = pneg %p408
      // Predicated region
      $region9: #{tpu_custom_call.1} parent=5 // pred_check
        _
      $region10: #{tpu_custom_call.1} parent=5 // pred_check_branch
        %411 = sbr.rel (%p408) target = $region12
      $region11: #{tpu_custom_call.1} parent=5 // pred_region
        %s412 = ssub.s32 %s22, 1
      $region12: #{tpu_custom_call.1} parent=5 // pred_fallthru
        _
      %p413 = scmp.lt.s32.totalorder %s22, 4
      // Predicated region
      $region13: #{tpu_custom_call.1} parent=5 // pred_check
        %p414 = pneg %p413
      $region14: #{tpu_custom_call.1} parent=5 // pred_check_branch
        %416 = sbr.rel (%p414) target = $region16
      $region15: #{tpu_custom_call.1} parent=5 // pred_region
        // Predicated region
        $region17: #{tpu_custom_call.1} parent=15 // pred_check
          %p417 = pneg %p54
        $region18: #{tpu_custom_call.1} parent=15 // pred_check_branch
          %419 = sbr.rel (%p417) target = $region20
        $region19: #{tpu_custom_call.1} parent=15 // pred_region
          %p420 = scmp.lt.s32.totalorder %s29, 1
          %s421 = scalar_select %p420, %s29, 1
          %s422 = smul.addr %s421, 8
          %s423 = scalar_lea.vmem %s0, %s422
        $region20: #{tpu_custom_call.1} parent=15 // pred_fallthru
          _
        // Predicated region
        $region21: #{tpu_custom_call.1} parent=15 // pred_check
          %p424 = pneg %p80
        $region22: #{tpu_custom_call.1} parent=15 // pred_check_branch
          %426 = sbr.rel (%p424) target = $region24
        $region23: #{tpu_custom_call.1} parent=15 // pred_region
          %p427 = scmp.lt.s32.totalorder %s30, 1
          %s428 = scalar_select %p427, %s30, 1
          %s429 = scalar_lea.vmem %s1, %s428
        $region24: #{tpu_custom_call.1} parent=15 // pred_fallthru
          _
        // Predicated region
        $region25: #{tpu_custom_call.1} parent=15 // pred_check
          %p430 = pneg %p106
        $region26: #{tpu_custom_call.1} parent=15 // pred_check_branch
          %432 = sbr.rel (%p430) target = $region28
        $region27: #{tpu_custom_call.1} parent=15 // pred_region
          %p433 = scmp.lt.s32.totalorder %s30, 1
          %s434 = scalar_select %p433, %s30, 1
          %s435 = scalar_lea.vmem %s2, %s434
        $region28: #{tpu_custom_call.1} parent=15 // pred_fallthru
          _
        // Predicated region
        $region29: #{tpu_custom_call.1} parent=15 // pred_check
          %p436 = pneg %p132
        $region30: #{tpu_custom_call.1} parent=15 // pred_check_branch
          %438 = sbr.rel (%p436) target = $region32
        $region31: #{tpu_custom_call.1} parent=15 // pred_region
          %p439 = scmp.lt.s32.totalorder %s30, 1
          %s440 = scalar_select %p439, %s30, 1
          %s441 = smul.addr %s440, 4
          %s442 = smul.addr %s441, 4
          %s443 = scalar_lea.vmem %s3, %s442
        $region32: #{tpu_custom_call.1} parent=15 // pred_fallthru
          _
        // Predicated region
        $region33: #{tpu_custom_call.1} parent=15 // pred_check
          %p444 = pneg %p158
        $region34: #{tpu_custom_call.1} parent=15 // pred_check_branch
          %446 = sbr.rel (%p444) target = $region36
        $region35: #{tpu_custom_call.1} parent=15 // pred_region
          %p447 = scmp.lt.s32.totalorder %s30, 1
          %s448 = scalar_select %p447, %s30, 1
          %s449 = scalar_lea.vmem %s4, %s448
        $region36: #{tpu_custom_call.1} parent=15 // pred_fallthru
          _
        // Predicated region
        $region37: #{tpu_custom_call.1} parent=15 // pred_check
          %p450 = pneg %p184
        $region38: #{tpu_custom_call.1} parent=15 // pred_check_branch
          %452 = sbr.rel (%p450) target = $region40
        $region39: #{tpu_custom_call.1} parent=15 // pred_region
          %p453 = scmp.lt.s32.totalorder %s30, 1
          %s454 = scalar_select %p453, %s30, 1
          %s455 = smul.addr %s454, 4
          %s456 = smul.addr %s455, 4
          %s457 = scalar_lea.vmem %s5, %s456
        $region40: #{tpu_custom_call.1} parent=15 // pred_fallthru
          _
        // Predicated region
        $region41: #{tpu_custom_call.1} parent=15 // pred_check
          %p458 = pneg %p210
        $region42: #{tpu_custom_call.1} parent=15 // pred_check_branch
          %460 = sbr.rel (%p458) target = $region44
        $region43: #{tpu_custom_call.1} parent=15 // pred_region
          %p461 = scmp.lt.s32.totalorder %s30, 1
          %s462 = scalar_select %p461, %s30, 1
          %s463 = scalar_lea.vmem %s6, %s462
        $region44: #{tpu_custom_call.1} parent=15 // pred_fallthru
          _
        // Predicated region
        $region45: #{tpu_custom_call.1} parent=15 // pred_check
          %p464 = pneg %p236
        $region46: #{tpu_custom_call.1} parent=15 // pred_check_branch
          %466 = sbr.rel (%p464) target = $region48
        $region47: #{tpu_custom_call.1} parent=15 // pred_region
          %p467 = scmp.lt.s32.totalorder %s30, 1
          %s468 = scalar_select %p467, %s30, 1
          %s469 = scalar_lea.vmem %s7, %s468
        $region48: #{tpu_custom_call.1} parent=15 // pred_fallthru
          _
        // Predicated region
        $region49: #{tpu_custom_call.1} parent=15 // pred_check
          %p470 = pneg %p262
        $region50: #{tpu_custom_call.1} parent=15 // pred_check_branch
          %472 = sbr.rel (%p470) target = $region52
        $region51: #{tpu_custom_call.1} parent=15 // pred_region
          %p473 = scmp.lt.s32.totalorder %s30, 1
          %s474 = scalar_select %p473, %s30, 1
          %s475 = scalar_lea.vmem %s8, %s474
        $region52: #{tpu_custom_call.1} parent=15 // pred_fallthru
          _
        // Predicated region
        $region53: #{tpu_custom_call.1} parent=15 // pred_check
          %p476 = pneg %p288
        $region54: #{tpu_custom_call.1} parent=15 // pred_check_branch
          %478 = sbr.rel (%p476) target = $region56
        $region55: #{tpu_custom_call.1} parent=15 // pred_region
          %p479 = scmp.lt.s32.totalorder %s30, 1
          %s480 = scalar_select %p479, %s30, 1
          %s481 = smul.addr %s480, 4
          %s482 = smul.addr %s481, 4
          %s483 = scalar_lea.vmem %s9, %s482
        $region56: #{tpu_custom_call.1} parent=15 // pred_fallthru
          _
        // Predicated region
        $region57: #{tpu_custom_call.1} parent=15 // pred_check
          %p484 = pneg %p314
        $region58: #{tpu_custom_call.1} parent=15 // pred_check_branch
          %486 = sbr.rel (%p484) target = $region60
        $region59: #{tpu_custom_call.1} parent=15 // pred_region
          %p487 = scmp.lt.s32.totalorder %s30, 1
          %s488 = scalar_select %p487, %s30, 1
          %s489 = scalar_lea.vmem %s10, %s488
        $region60: #{tpu_custom_call.1} parent=15 // pred_fallthru
          _
        // Predicated region
        $region61: #{tpu_custom_call.1} parent=15 // pred_check
          %p490 = pneg %p340
        $region62: #{tpu_custom_call.1} parent=15 // pred_check_branch
          %492 = sbr.rel (%p490) target = $region64
        $region63: #{tpu_custom_call.1} parent=15 // pred_region
          %p493 = scmp.lt.s32.totalorder %s30, 1
          %s494 = scalar_select %p493, %s30, 1
          %s495 = smul.addr %s494, 16
          %s496 = smul.addr %s495, 4
          %s497 = scalar_lea.vmem %s11, %s496
        $region64: #{tpu_custom_call.1} parent=15 // pred_fallthru
          _
        // Predicated region
        $region65: #{tpu_custom_call.1} parent=15 // pred_check
          %p498 = pneg %p366
        $region66: #{tpu_custom_call.1} parent=15 // pred_check_branch
          %500 = sbr.rel (%p498) target = $region68
        $region67: #{tpu_custom_call.1} parent=15 // pred_region
          %p501 = scmp.lt.s32.totalorder %s30, 1
          %s502 = scalar_select %p501, %s30, 1
          %s503 = scalar_lea.vmem %s12, %s502
        $region68: #{tpu_custom_call.1} parent=15 // pred_fallthru
          _
      $region16: #{tpu_custom_call.1} parent=5 // pred_fallthru
        _
      %p504 = scmp.le.s32.totalorder 1, %s22
      %p505 = scmp.lt.s32.totalorder %s22, 5
      %p506 = pnand %p504, %p505
      %p507 = pneg %p506
      // Predicated region
      $region69: #{tpu_custom_call.1} parent=5 // pred_check
        _
      $region70: #{tpu_custom_call.1} parent=5 // pred_check_branch
        %509 = sbr.rel (%p506) target = $region72
      $region71: #{tpu_custom_call.1} parent=5 // pred_region
        %s510 = ssub.s32 %s22, 1
        %p511 = scmp.lt.s32.totalorder %s31, 1
        %s512 = scalar_select %p511, %s31, 1
        %s513 = smul.addr %s512, 8
        %s514 = scalar_lea.vmem %s0, %s513
        %p515 = pneg %p60
        %p516 = pneg %p57
        %p517 = scmp.lt.s32.totalorder %s32, 1
        %s518 = scalar_select %p517, %s32, 1
        %s519 = scalar_lea.vmem %s1, %s518
        %p520 = pneg %p86
        %p521 = pneg %p83
        %p522 = scmp.lt.s32.totalorder %s32, 1
        %s523 = scalar_select %p522, %s32, 1
        %s524 = scalar_lea.vmem %s2, %s523
        %p525 = pneg %p112
        %p526 = pneg %p109
        %p527 = scmp.lt.s32.totalorder %s32, 1
        %s528 = scalar_select %p527, %s32, 1
        %s529 = smul.addr %s528, 4
        %s530 = smul.addr %s529, 4
        %s531 = scalar_lea.vmem %s3, %s530
        %p532 = pneg %p138
        %p533 = pneg %p135
        %p534 = scmp.lt.s32.totalorder %s32, 1
        %s535 = scalar_select %p534, %s32, 1
        %s536 = scalar_lea.vmem %s4, %s535
        %p537 = pneg %p164
        %p538 = pneg %p161
        %p539 = scmp.lt.s32.totalorder %s32, 1
        %s540 = scalar_select %p539, %s32, 1
        %s541 = smul.addr %s540, 4
        %s542 = smul.addr %s541, 4
        %s543 = scalar_lea.vmem %s5, %s542
        %p544 = pneg %p190
        %p545 = pneg %p187
        %p546 = scmp.lt.s32.totalorder %s32, 1
        %s547 = scalar_select %p546, %s32, 1
        %s548 = scalar_lea.vmem %s6, %s547
        %p549 = pneg %p216
        %p550 = pneg %p213
        %p551 = scmp.lt.s32.totalorder %s32, 1
        %s552 = scalar_select %p551, %s32, 1
        %s553 = scalar_lea.vmem %s7, %s552
        %p554 = pneg %p242
        %p555 = pneg %p239
        %p556 = scmp.lt.s32.totalorder %s32, 1
        %s557 = scalar_select %p556, %s32, 1
        %s558 = scalar_lea.vmem %s8, %s557
        %p559 = pneg %p268
        %p560 = pneg %p265
        %p561 = scmp.lt.s32.totalorder %s32, 1
        %s562 = scalar_select %p561, %s32, 1
        %s563 = smul.addr %s562, 4
        %s564 = smul.addr %s563, 4
        %s565 = scalar_lea.vmem %s9, %s564
        %p566 = pneg %p294
        %p567 = pneg %p291
        %p568 = scmp.lt.s32.totalorder %s32, 1
        %s569 = scalar_select %p568, %s32, 1
        %s570 = scalar_lea.vmem %s10, %s569
        %p571 = pneg %p320
        %p572 = pneg %p317
        %p573 = scmp.lt.s32.totalorder %s32, 1
        %s574 = scalar_select %p573, %s32, 1
        %s575 = smul.addr %s574, 16
        %s576 = smul.addr %s575, 4
        %s577 = scalar_lea.vmem %s11, %s576
        %p578 = pneg %p346
        %p579 = pneg %p343
        %p580 = scmp.lt.s32.totalorder %s32, 1
        %s581 = scalar_select %p580, %s32, 1
        %s582 = scalar_lea.vmem %s12, %s581
        %p583 = pneg %p372
        %p584 = pneg %p369
        %p585 = pneg %p398
        %p586 = pneg %p395
        %s587 = sand.u32 %s385, 1
        %s588 = scalar_lea.sflag [#allocation4], %s587
        %s589 = sand.u32 %s385, 1
        %s590 = smul.addr %s589, 8
        %s591 = scalar_lea.vmem [#allocation3], %s590
        %p592 = scmp.lt.s32.totalorder %s31, 1
        %s593 = scalar_select %p592, %s31, 1
        %s594 = smul.addr %s593, 8
        %s595 = scalar_lea.vmem %s0, %s594
        %p596 = scmp.lt.s32.totalorder %s32, 1
        %s597 = scalar_select %p596, %s32, 1
        %s598 = scalar_lea.vmem %s1, %s597
        %p599 = scmp.lt.s32.totalorder %s32, 1
        %s600 = scalar_select %p599, %s32, 1
        %s601 = scalar_lea.vmem %s2, %s600
        %p602 = scmp.lt.s32.totalorder %s32, 1
        %s603 = scalar_select %p602, %s32, 1
        %s604 = smul.addr %s603, 4
        %s605 = smul.addr %s604, 4
        %s606 = scalar_lea.vmem %s3, %s605
        %p607 = scmp.lt.s32.totalorder %s32, 1
        %s608 = scalar_select %p607, %s32, 1
        %s609 = scalar_lea.vmem %s4, %s608
        %p610 = scmp.lt.s32.totalorder %s32, 1
        %s611 = scalar_select %p610, %s32, 1
        %s612 = smul.addr %s611, 4
        %s613 = smul.addr %s612, 4
        %s614 = scalar_lea.vmem %s5, %s613
        %p615 = scmp.lt.s32.totalorder %s32, 1
        %s616 = scalar_select %p615, %s32, 1
        %s617 = scalar_lea.vmem %s6, %s616
        %p618 = scmp.lt.s32.totalorder %s32, 1
        %s619 = scalar_select %p618, %s32, 1
        %s620 = scalar_lea.vmem %s7, %s619
        %p621 = scmp.lt.s32.totalorder %s32, 1
        %s622 = scalar_select %p621, %s32, 1
        %s623 = scalar_lea.vmem %s8, %s622
        %p624 = scmp.lt.s32.totalorder %s32, 1
        %s625 = scalar_select %p624, %s32, 1
        %s626 = smul.addr %s625, 4
        %s627 = smul.addr %s626, 4
        %s628 = scalar_lea.vmem %s9, %s627
        %p629 = scmp.lt.s32.totalorder %s32, 1
        %s630 = scalar_select %p629, %s32, 1
        %s631 = scalar_lea.vmem %s10, %s630
        %p632 = scmp.lt.s32.totalorder %s32, 1
        %s633 = scalar_select %p632, %s32, 1
        %s634 = smul.addr %s633, 16
        %s635 = smul.addr %s634, 4
        %s636 = scalar_lea.vmem %s11, %s635
        %p637 = scmp.lt.s32.totalorder %s32, 1
        %s638 = scalar_select %p637, %s32, 1
        %s639 = scalar_lea.vmem %s12, %s638
        %p641 = scmp.eq.s32.totalorder %s32, 0
        // Predicated region
        $region73: #{tpu_custom_call.1} parent=71 // pred_check
          %p642 = pneg %p641
        $region74: #{tpu_custom_call.1} parent=71 // pred_check_branch
          %644 = sbr.rel (%p642) target = $region76
        $region75: #{tpu_custom_call.1} parent=71 // pred_region
          %v645 = vld [vmem:[%s595] sm:$0xff]
          %vm646 = vcmask 261120
          %647 = vst.msk [vmem:[#allocation2] sm:$0xff] %vm646, %v645
        $region76: #{tpu_custom_call.1} parent=71 // pred_fallthru
          _
        %v648 = vld [vmem:[#allocation2] sm:$0xff]
        %vm649 = vcmask 261120
        %v650 = vsel %vm649, %v648, 0.0
        %651 = vadd.xlane.f32.xlu0 %v650
        %v652 = vpop.xlane.xlu0 %651
        %v653 = vrcp.pop 32.0
        %v654 = vmul.f32 %v652, %v653
        %v655 = vsub.f32 %v648, %v654
        %v656 = vmul.f32 %v655, %v655
        %v657 = vsel %vm649, %v656, 0.0
        %658 = vadd.xlane.f32.xlu0 %v657
        %v659 = vpop.xlane.xlu0 %658
        %v660 = vmul.f32 %v659, %v653
        %v661 = vadd.f32 %v660, 1e-05
        %v662 = vrsqrt.pop %v661
        %v663 = vmul.f32 %v655, %v662
        %v664 = vld [vmem:[%s598] sm:$0x1]
        %v666 = vlaneseq
        %v667 = vshrl.u32 %v666, 7
        %v668 = vsub.s32 0, %v667
        %v669 = vrot.slane %v664, %v668
        %v671 = vmul.f32 %v663, %v669
        %v672 = vld [vmem:[%s601] sm:$0x1]
        %v674 = vlaneseq
        %v675 = vshrl.u32 %v674, 7
        %v676 = vsub.s32 0, %v675
        %v677 = vrot.slane %v672, %v676
        %v679 = vadd.f32 %v671, %v677
        %v680 = vpack.c.bf16 %v679, %v679
        %v681 = vld [vmem:[%s606] sm:$0xf]
        %v682 = vld [vmem:[%s606 + $0x4] sm:$0xf]
        %v683 = vld [vmem:[%s606 + $0x8] sm:$0xf]
        %v684 = vld [vmem:[%s606 + $0xc] sm:$0xf]
        %v685 = vld [vmem:[%s609] sm:$0x1]
        %v687 = vlaneseq
        %v688 = vshrl.u32 %v687, 7
        %v689 = vsub.s32 0, %v688
        %v690 = vrot.slane %v685, %v689
        %v696 = vunpack.c.l.b16 %v681
        %v697 = vunpack.c.l.b16 %v682
        %v698 = vunpack.c.l.b16 %v683
        %v699 = vunpack.c.l.b16 %v684
        %v700 = vpack.c.b16 %v697, %v696
        %v701 = vpack.c.b16 %v699, %v698
        %v705 = vsel %vm649, %v680, 0
        %707 = vmatprep.subr.bf16.mxu0 0
        %708 = vmatpush1.bf16.msra.mxu0 0
        %709 = vmatprep.subr.bf16.mxu0 0
        %710 = vmatpush1.bf16.msra.mxu0 0
        %711 = vmatprep.subr.bf16.mxu0 0
        %712 = vmatpush1.bf16.msra.mxu0 0
        %713 = vmatprep.subr.bf16.mxu0 0
        %714 = vmatpush1.bf16.msra.mxu0 0
        %715 = vmatprep.subr.bf16.mxu0 0
        %716 = vmatpush1.bf16.msra.mxu0 0
        %717 = vmatprep.subr.bf16.mxu0 0
        %718 = vmatpush1.bf16.msra.mxu0 0
        %719 = vmatprep.subr.bf16.mxu0 0
        %720 = vmatpush1.bf16.msra.mxu0 %v701
        %721 = vmatprep.subr.bf16.mxu0 0
        %722 = vmatpush1.bf16.msra.mxu0 %v700
        %723 = vmatprep.subr.bf16.mxu0 0
        %724 = vmatpush2.bf16.msra.mxu0 0
        %725 = vmatprep.subr.bf16.mxu0 0
        %726 = vmatpush2.bf16.msra.mxu0 0
        %727 = vmatprep.subr.bf16.mxu0 0
        %728 = vmatpush2.bf16.msra.mxu0 0
        %729 = vmatprep.subr.bf16.mxu0 0
        %730 = vmatpush2.bf16.msra.mxu0 0
        %731 = vmatprep.subr.bf16.mxu0 0
        %732 = vmatpush2.bf16.msra.mxu0 0
        %733 = vmatprep.subr.bf16.mxu0 0
        %734 = vmatpush2.bf16.msra.mxu0 0
        %735 = vmatprep.subr.bf16.mxu0 0
        %736 = vmatpush2.bf16.msra.mxu0 0
        %737 = vmatprep.subr.bf16.mxu0 0
        %738 = vmatpush2.bf16.msra.mxu0 0
        %739 = vmatprep.mubr.bf16.mxu0 0
        %740 = vmatmul.mubr.bf16.gmra.mxu0 %v705
        %v741 = vpop.f32.mrf.mxu0
        %v742 = vadd.f32 %v690, %v741
        %v743 = vpop.f32.mrf.mxu0
        %v744 = vpop.f32.mrf.mxu0
        %v745 = vpop.f32.mrf.mxu0
        %746 = vdwg.mxu0
        %748 = vrot.lane.b32.xlu0 %v742, 120
        %v749 = vpop.permute.xlu0 %748
        %751 = vrot.lane.b32.xlu0 %v742, 112
        %v752 = vpop.permute.xlu0 %751
        %754 = vrot.lane.b32.xlu0 %v742, 104
        %v755 = vpop.permute.xlu0 %754
        %v757 = vpack.c.bf16 %v742, %v742
        %v758 = vpack.c.bf16 %v749, %v749
        %v759 = vpack.c.bf16 %v752, %v752
        %v760 = vpack.c.bf16 %v755, %v755
        %762 = vrot.lane.b32.xlu0 %v757, 96
        %v763 = vpop.permute.xlu0 %762
        %vm764 = vcmask 64512
        %v766 = vsel %vm764, %v757, 0
        %v769 = vsel %vm764, %v763, 0
        %771 = vmatprep.subr.bf16.mxu0 0
        %772 = vmatpush1.bf16.xpose.msra.mxu0 0
        %773 = vmatprep.subr.bf16.mxu0 0
        %774 = vmatpush1.bf16.xpose.msra.mxu0 0
        %775 = vmatprep.subr.bf16.mxu0 0
        %776 = vmatpush1.bf16.xpose.msra.mxu0 0
        %777 = vmatprep.subr.bf16.mxu0 0
        %778 = vmatpush1.bf16.xpose.msra.mxu0 0
        %779 = vmatprep.subr.bf16.mxu0 0
        %780 = vmatpush1.bf16.xpose.msra.mxu0 0
        %781 = vmatprep.subr.bf16.mxu0 0
        %782 = vmatpush1.bf16.xpose.msra.mxu0 0
        %783 = vmatprep.subr.bf16.mxu0 0
        %784 = vmatpush1.bf16.xpose.msra.mxu0 0
        %785 = vmatprep.subr.bf16.mxu0 0
        %786 = vmatpush1.bf16.xpose.msra.mxu0 %v769
        %787 = vmatprep.subr.bf16.mxu0 0
        %788 = vmatpush2.bf16.xpose.msra.mxu0 0
        %789 = vmatprep.subr.bf16.mxu0 0
        %790 = vmatpush2.bf16.xpose.msra.mxu0 0
        %791 = vmatprep.subr.bf16.mxu0 0
        %792 = vmatpush2.bf16.xpose.msra.mxu0 0
        %793 = vmatprep.subr.bf16.mxu0 0
        %794 = vmatpush2.bf16.xpose.msra.mxu0 0
        %795 = vmatprep.subr.bf16.mxu0 0
        %796 = vmatpush2.bf16.xpose.msra.mxu0 0
        %797 = vmatprep.subr.bf16.mxu0 0
        %798 = vmatpush2.bf16.xpose.msra.mxu0 0
        %799 = vmatprep.subr.bf16.mxu0 0
        %800 = vmatpush2.bf16.xpose.msra.mxu0 0
        %801 = vmatprep.subr.bf16.mxu0 0
        %802 = vmatpush2.bf16.xpose.msra.mxu0 0
        %803 = vmatprep.mubr.bf16.mxu0 0
        %804 = vmatmul.mubr.bf16.gmra.mxu0 %v766
        %v805 = vpop.f32.mrf.mxu0
        %v806 = vadd.f32 0.0, %v805
        %v807 = vpop.f32.mrf.mxu0
        %v808 = vpop.f32.mrf.mxu0
        %v809 = vpop.f32.mrf.mxu0
        %810 = vdwg.mxu0
        %812 = vrot.lane.b32.xlu0 %v758, 96
        %v813 = vpop.permute.xlu0 %812
        %v815 = vsel %vm764, %v758, 0
        %v818 = vsel %vm764, %v813, 0
        %820 = vmatprep.subr.bf16.mxu0 0
        %821 = vmatpush1.bf16.xpose.msra.mxu0 0
        %822 = vmatprep.subr.bf16.mxu0 0
        %823 = vmatpush1.bf16.xpose.msra.mxu0 0
        %824 = vmatprep.subr.bf16.mxu0 0
        %825 = vmatpush1.bf16.xpose.msra.mxu0 0
        %826 = vmatprep.subr.bf16.mxu0 0
        %827 = vmatpush1.bf16.xpose.msra.mxu0 0
        %828 = vmatprep.subr.bf16.mxu0 0
        %829 = vmatpush1.bf16.xpose.msra.mxu0 0
        %830 = vmatprep.subr.bf16.mxu0 0
        %831 = vmatpush1.bf16.xpose.msra.mxu0 0
        %832 = vmatprep.subr.bf16.mxu0 0
        %833 = vmatpush1.bf16.xpose.msra.mxu0 0
        %834 = vmatprep.subr.bf16.mxu0 0
        %835 = vmatpush1.bf16.xpose.msra.mxu0 %v818
        %836 = vmatprep.subr.bf16.mxu0 0
        %837 = vmatpush2.bf16.xpose.msra.mxu0 0
        %838 = vmatprep.subr.bf16.mxu0 0
        %839 = vmatpush2.bf16.xpose.msra.mxu0 0
        %840 = vmatprep.subr.bf16.mxu0 0
        %841 = vmatpush2.bf16.xpose.msra.mxu0 0
        %842 = vmatprep.subr.bf16.mxu0 0
        %843 = vmatpush2.bf16.xpose.msra.mxu0 0
        %844 = vmatprep.subr.bf16.mxu0 0
        %845 = vmatpush2.bf16.xpose.msra.mxu0 0
        %846 = vmatprep.subr.bf16.mxu0 0
        %847 = vmatpush2.bf16.xpose.msra.mxu0 0
        %848 = vmatprep.subr.bf16.mxu0 0
        %849 = vmatpush2.bf16.xpose.msra.mxu0 0
        %850 = vmatprep.subr.bf16.mxu0 0
        %851 = vmatpush2.bf16.xpose.msra.mxu0 0
        %852 = vmatprep.mubr.bf16.mxu0 0
        %853 = vmatmul.mubr.bf16.gmra.mxu0 %v815
        %v854 = vpop.f32.mrf.mxu0
        %v855 = vadd.f32 0.0, %v854
        %v856 = vpop.f32.mrf.mxu0
        %v857 = vpop.f32.mrf.mxu0
        %v858 = vpop.f32.mrf.mxu0
        %859 = vdwg.mxu0
        %861 = vrot.lane.b32.xlu0 %v759, 96
        %v862 = vpop.permute.xlu0 %861
        %v864 = vsel %vm764, %v759, 0
        %v867 = vsel %vm764, %v862, 0
        %869 = vmatprep.subr.bf16.mxu0 0
        %870 = vmatpush1.bf16.xpose.msra.mxu0 0
        %871 = vmatprep.subr.bf16.mxu0 0
        %872 = vmatpush1.bf16.xpose.msra.mxu0 0
        %873 = vmatprep.subr.bf16.mxu0 0
        %874 = vmatpush1.bf16.xpose.msra.mxu0 0
        %875 = vmatprep.subr.bf16.mxu0 0
        %876 = vmatpush1.bf16.xpose.msra.mxu0 0
        %877 = vmatprep.subr.bf16.mxu0 0
        %878 = vmatpush1.bf16.xpose.msra.mxu0 0
        %879 = vmatprep.subr.bf16.mxu0 0
        %880 = vmatpush1.bf16.xpose.msra.mxu0 0
        %881 = vmatprep.subr.bf16.mxu0 0
        %882 = vmatpush1.bf16.xpose.msra.mxu0 0
        %883 = vmatprep.subr.bf16.mxu0 0
        %884 = vmatpush1.bf16.xpose.msra.mxu0 %v867
        %885 = vmatprep.subr.bf16.mxu0 0
        %886 = vmatpush2.bf16.xpose.msra.mxu0 0
        %887 = vmatprep.subr.bf16.mxu0 0
        %888 = vmatpush2.bf16.xpose.msra.mxu0 0
        %889 = vmatprep.subr.bf16.mxu0 0
        %890 = vmatpush2.bf16.xpose.msra.mxu0 0
        %891 = vmatprep.subr.bf16.mxu0 0
        %892 = vmatpush2.bf16.xpose.msra.mxu0 0
        %893 = vmatprep.subr.bf16.mxu0 0
        %894 = vmatpush2.bf16.xpose.msra.mxu0 0
        %895 = vmatprep.subr.bf16.mxu0 0
        %896 = vmatpush2.bf16.xpose.msra.mxu0 0
        %897 = vmatprep.subr.bf16.mxu0 0
        %898 = vmatpush2.bf16.xpose.msra.mxu0 0
        %899 = vmatprep.subr.bf16.mxu0 0
        %900 = vmatpush2.bf16.xpose.msra.mxu0 0
        %901 = vmatprep.mubr.bf16.mxu0 0
        %902 = vmatmul.mubr.bf16.gmra.mxu0 %v864
        %v903 = vpop.f32.mrf.mxu0
        %v904 = vadd.f32 0.0, %v903
        %v905 = vpop.f32.mrf.mxu0
        %v906 = vpop.f32.mrf.mxu0
        %v907 = vpop.f32.mrf.mxu0
        %908 = vdwg.mxu0
        %910 = vrot.lane.b32.xlu0 %v760, 96
        %v911 = vpop.permute.xlu0 %910
        %v913 = vsel %vm764, %v760, 0
        %v916 = vsel %vm764, %v911, 0
        %918 = vmatprep.subr.bf16.mxu0 0
        %919 = vmatpush1.bf16.xpose.msra.mxu0 0
        %920 = vmatprep.subr.bf16.mxu0 0
        %921 = vmatpush1.bf16.xpose.msra.mxu0 0
        %922 = vmatprep.subr.bf16.mxu0 0
        %923 = vmatpush1.bf16.xpose.msra.mxu0 0
        %924 = vmatprep.subr.bf16.mxu0 0
        %925 = vmatpush1.bf16.xpose.msra.mxu0 0
        %926 = vmatprep.subr.bf16.mxu0 0
        %927 = vmatpush1.bf16.xpose.msra.mxu0 0
        %928 = vmatprep.subr.bf16.mxu0 0
        %929 = vmatpush1.bf16.xpose.msra.mxu0 0
        %930 = vmatprep.subr.bf16.mxu0 0
        %931 = vmatpush1.bf16.xpose.msra.mxu0 0
        %932 = vmatprep.subr.bf16.mxu0 0
        %933 = vmatpush1.bf16.xpose.msra.mxu0 %v916
        %934 = vmatprep.subr.bf16.mxu0 0
        %935 = vmatpush2.bf16.xpose.msra.mxu0 0
        %936 = vmatprep.subr.bf16.mxu0 0
        %937 = vmatpush2.bf16.xpose.msra.mxu0 0
        %938 = vmatprep.subr.bf16.mxu0 0
        %939 = vmatpush2.bf16.xpose.msra.mxu0 0
        %940 = vmatprep.subr.bf16.mxu0 0
        %941 = vmatpush2.bf16.xpose.msra.mxu0 0
        %942 = vmatprep.subr.bf16.mxu0 0
        %943 = vmatpush2.bf16.xpose.msra.mxu0 0
        %944 = vmatprep.subr.bf16.mxu0 0
        %945 = vmatpush2.bf16.xpose.msra.mxu0 0
        %946 = vmatprep.subr.bf16.mxu0 0
        %947 = vmatpush2.bf16.xpose.msra.mxu0 0
        %948 = vmatprep.subr.bf16.mxu0 0
        %949 = vmatpush2.bf16.xpose.msra.mxu0 0
        %950 = vmatprep.mubr.bf16.mxu0 0
        %951 = vmatmul.mubr.bf16.gmra.mxu0 %v913
        %v952 = vpop.f32.mrf.mxu0
        %v953 = vadd.f32 0.0, %v952
        %v954 = vpop.f32.mrf.mxu0
        %v955 = vpop.f32.mrf.mxu0
        %v956 = vpop.f32.mrf.mxu0
        %957 = vdwg.mxu0
        %v958 = vsel %vm764, %v806, -inf
        %959 = vmax.xlane.f32.xlu0 %v958
        %v960 = vpop.xlane.xlu0 %959
        %v961 = vsel %vm764, %v855, -inf
        %962 = vmax.xlane.f32.xlu0 %v961
        %v963 = vpop.xlane.xlu0 %962
        %v964 = vsel %vm764, %v904, -inf
        %965 = vmax.xlane.f32.xlu0 %v964
        %v966 = vpop.xlane.xlu0 %965
        %v967 = vsel %vm764, %v953, -inf
        %968 = vmax.xlane.f32.xlu0 %v967
        %v969 = vpop.xlane.xlu0 %968
        %v970 = vsub.f32 %v806, %v960
        %v971 = vsub.f32 %v855, %v963
        %v972 = vsub.f32 %v904, %v966
        %v973 = vsub.f32 %v953, %v969
        %v974 = vmul.f32 %v970, 1.442695
        %v975 = vpow.pop %v974
        %v976 = vmul.f32 %v971, 1.442695
        %v977 = vpow.pop %v976
        %v978 = vmul.f32 %v972, 1.442695
        %v979 = vpow.pop %v978
        %v980 = vmul.f32 %v973, 1.442695
        %v981 = vpow.pop %v980
        %v982 = vsel %vm764, %v975, 0.0
        %983 = vadd.xlane.f32.xlu0 %v982
        %v984 = vpop.xlane.xlu0 %983
        %v985 = vsel %vm764, %v977, 0.0
        %986 = vadd.xlane.f32.xlu0 %v985
        %v987 = vpop.xlane.xlu0 %986
        %v988 = vsel %vm764, %v979, 0.0
        %989 = vadd.xlane.f32.xlu0 %v988
        %v990 = vpop.xlane.xlu0 %989
        %v991 = vsel %vm764, %v981, 0.0
        %992 = vadd.xlane.f32.xlu0 %v991
        %v993 = vpop.xlane.xlu0 %992
        %v994 = vrcp.pop %v984
        %v995 = vrcp.pop %v987
        %v996 = vrcp.pop %v990
        %v997 = vrcp.pop %v993
        %v998 = vmul.f32 %v975, %v994
        %v999 = vmul.f32 %v977, %v995
        %v1000 = vmul.f32 %v979, %v996
        %v1001 = vmul.f32 %v981, %v997
        %v1002 = vpack.c.bf16 %v998, %v998
        %v1003 = vpack.c.bf16 %v999, %v999
        %v1004 = vpack.c.bf16 %v1000, %v1000
        %v1005 = vpack.c.bf16 %v1001, %v1001
        %1006 = vrot.lane.b32.xlu0 %v757, 64
        %v1007 = vpop.permute.xlu0 %1006
        %v1009 = vsel %vm764, %v1002, 0
        %vm1011 = vcmask 1043456
        %v1013 = vsel %vm1011, %v1007, 0
        %1015 = vmatprep.subr.bf16.mxu0 0
        %1016 = vmatpush1.bf16.msra.mxu0 0
        %1017 = vmatprep.subr.bf16.mxu0 0
        %1018 = vmatpush1.bf16.msra.mxu0 0
        %1019 = vmatprep.subr.bf16.mxu0 0
        %1020 = vmatpush1.bf16.msra.mxu0 0
        %1021 = vmatprep.subr.bf16.mxu0 0
        %1022 = vmatpush1.bf16.msra.mxu0 0
        %1023 = vmatprep.subr.bf16.mxu0 0
        %1024 = vmatpush1.bf16.msra.mxu0 0
        %1025 = vmatprep.subr.bf16.mxu0 0
        %1026 = vmatpush1.bf16.msra.mxu0 0
        %1027 = vmatprep.subr.bf16.mxu0 0
        %1028 = vmatpush1.bf16.msra.mxu0 0
        %1029 = vmatprep.subr.bf16.mxu0 0
        %1030 = vmatpush1.bf16.msra.mxu0 %v1013
        %1031 = vmatprep.subr.bf16.mxu0 0
        %1032 = vmatpush2.bf16.msra.mxu0 0
        %1033 = vmatprep.subr.bf16.mxu0 0
        %1034 = vmatpush2.bf16.msra.mxu0 0
        %1035 = vmatprep.subr.bf16.mxu0 0
        %1036 = vmatpush2.bf16.msra.mxu0 0
        %1037 = vmatprep.subr.bf16.mxu0 0
        %1038 = vmatpush2.bf16.msra.mxu0 0
        %1039 = vmatprep.subr.bf16.mxu0 0
        %1040 = vmatpush2.bf16.msra.mxu0 0
        %1041 = vmatprep.subr.bf16.mxu0 0
        %1042 = vmatpush2.bf16.msra.mxu0 0
        %1043 = vmatprep.subr.bf16.mxu0 0
        %1044 = vmatpush2.bf16.msra.mxu0 0
        %1045 = vmatprep.subr.bf16.mxu0 0
        %1046 = vmatpush2.bf16.msra.mxu0 0
        %1047 = vmatprep.mubr.bf16.mxu0 0
        %1048 = vmatmul.mubr.bf16.gmra.mxu0 %v1009
        %v1049 = vpop.f32.mrf.mxu0
        %v1050 = vadd.f32 0.0, %v1049
        %v1051 = vpop.f32.mrf.mxu0
        %v1052 = vpop.f32.mrf.mxu0
        %v1053 = vpop.f32.mrf.mxu0
        %1054 = vdwg.mxu0
        %1055 = vrot.lane.b32.xlu0 %v758, 64
        %v1056 = vpop.permute.xlu0 %1055
        %v1058 = vsel %vm764, %v1003, 0
        %v1061 = vsel %vm1011, %v1056, 0
        %1063 = vmatprep.subr.bf16.mxu0 0
        %1064 = vmatpush1.bf16.msra.mxu0 0
        %1065 = vmatprep.subr.bf16.mxu0 0
        %1066 = vmatpush1.bf16.msra.mxu0 0
        %1067 = vmatprep.subr.bf16.mxu0 0
        %1068 = vmatpush1.bf16.msra.mxu0 0
        %1069 = vmatprep.subr.bf16.mxu0 0
        %1070 = vmatpush1.bf16.msra.mxu0 0
        %1071 = vmatprep.subr.bf16.mxu0 0
        %1072 = vmatpush1.bf16.msra.mxu0 0
        %1073 = vmatprep.subr.bf16.mxu0 0
        %1074 = vmatpush1.bf16.msra.mxu0 0
        %1075 = vmatprep.subr.bf16.mxu0 0
        %1076 = vmatpush1.bf16.msra.mxu0 0
        %1077 = vmatprep.subr.bf16.mxu0 0
        %1078 = vmatpush1.bf16.msra.mxu0 %v1061
        %1079 = vmatprep.subr.bf16.mxu0 0
        %1080 = vmatpush2.bf16.msra.mxu0 0
        %1081 = vmatprep.subr.bf16.mxu0 0
        %1082 = vmatpush2.bf16.msra.mxu0 0
        %1083 = vmatprep.subr.bf16.mxu0 0
        %1084 = vmatpush2.bf16.msra.mxu0 0
        %1085 = vmatprep.subr.bf16.mxu0 0
        %1086 = vmatpush2.bf16.msra.mxu0 0
        %1087 = vmatprep.subr.bf16.mxu0 0
        %1088 = vmatpush2.bf16.msra.mxu0 0
        %1089 = vmatprep.subr.bf16.mxu0 0
        %1090 = vmatpush2.bf16.msra.mxu0 0
        %1091 = vmatprep.subr.bf16.mxu0 0
        %1092 = vmatpush2.bf16.msra.mxu0 0
        %1093 = vmatprep.subr.bf16.mxu0 0
        %1094 = vmatpush2.bf16.msra.mxu0 0
        %1095 = vmatprep.mubr.bf16.mxu0 0
        %1096 = vmatmul.mubr.bf16.gmra.mxu0 %v1058
        %v1097 = vpop.f32.mrf.mxu0
        %v1098 = vadd.f32 0.0, %v1097
        %v1099 = vpop.f32.mrf.mxu0
        %v1100 = vpop.f32.mrf.mxu0
        %v1101 = vpop.f32.mrf.mxu0
        %1102 = vdwg.mxu0
        %1103 = vrot.lane.b32.xlu0 %v759, 64
        %v1104 = vpop.permute.xlu0 %1103
        %v1106 = vsel %vm764, %v1004, 0
        %v1109 = vsel %vm1011, %v1104, 0
        %1111 = vmatprep.subr.bf16.mxu0 0
        %1112 = vmatpush1.bf16.msra.mxu0 0
        %1113 = vmatprep.subr.bf16.mxu0 0
        %1114 = vmatpush1.bf16.msra.mxu0 0
        %1115 = vmatprep.subr.bf16.mxu0 0
        %1116 = vmatpush1.bf16.msra.mxu0 0
        %1117 = vmatprep.subr.bf16.mxu0 0
        %1118 = vmatpush1.bf16.msra.mxu0 0
        %1119 = vmatprep.subr.bf16.mxu0 0
        %1120 = vmatpush1.bf16.msra.mxu0 0
        %1121 = vmatprep.subr.bf16.mxu0 0
        %1122 = vmatpush1.bf16.msra.mxu0 0
        %1123 = vmatprep.subr.bf16.mxu0 0
        %1124 = vmatpush1.bf16.msra.mxu0 0
        %1125 = vmatprep.subr.bf16.mxu0 0
        %1126 = vmatpush1.bf16.msra.mxu0 %v1109
        %1127 = vmatprep.subr.bf16.mxu0 0
        %1128 = vmatpush2.bf16.msra.mxu0 0
        %1129 = vmatprep.subr.bf16.mxu0 0
        %1130 = vmatpush2.bf16.msra.mxu0 0
        %1131 = vmatprep.subr.bf16.mxu0 0
        %1132 = vmatpush2.bf16.msra.mxu0 0
        %1133 = vmatprep.subr.bf16.mxu0 0
        %1134 = vmatpush2.bf16.msra.mxu0 0
        %1135 = vmatprep.subr.bf16.mxu0 0
        %1136 = vmatpush2.bf16.msra.mxu0 0
        %1137 = vmatprep.subr.bf16.mxu0 0
        %1138 = vmatpush2.bf16.msra.mxu0 0
        %1139 = vmatprep.subr.bf16.mxu0 0
        %1140 = vmatpush2.bf16.msra.mxu0 0
        %1141 = vmatprep.subr.bf16.mxu0 0
        %1142 = vmatpush2.bf16.msra.mxu0 0
        %1143 = vmatprep.mubr.bf16.mxu0 0
        %1144 = vmatmul.mubr.bf16.gmra.mxu0 %v1106
        %v1145 = vpop.f32.mrf.mxu0
        %v1146 = vadd.f32 0.0, %v1145
        %v1147 = vpop.f32.mrf.mxu0
        %v1148 = vpop.f32.mrf.mxu0
        %v1149 = vpop.f32.mrf.mxu0
        %1150 = vdwg.mxu0
        %1151 = vrot.lane.b32.xlu0 %v760, 64
        %v1152 = vpop.permute.xlu0 %1151
        %v1154 = vsel %vm764, %v1005, 0
        %v1157 = vsel %vm1011, %v1152, 0
        %1159 = vmatprep.subr.bf16.mxu0 0
        %1160 = vmatpush1.bf16.msra.mxu0 0
        %1161 = vmatprep.subr.bf16.mxu0 0
        %1162 = vmatpush1.bf16.msra.mxu0 0
        %1163 = vmatprep.subr.bf16.mxu0 0
        %1164 = vmatpush1.bf16.msra.mxu0 0
        %1165 = vmatprep.subr.bf16.mxu0 0
        %1166 = vmatpush1.bf16.msra.mxu0 0
        %1167 = vmatprep.subr.bf16.mxu0 0
        %1168 = vmatpush1.bf16.msra.mxu0 0
        %1169 = vmatprep.subr.bf16.mxu0 0
        %1170 = vmatpush1.bf16.msra.mxu0 0
        %1171 = vmatprep.subr.bf16.mxu0 0
        %1172 = vmatpush1.bf16.msra.mxu0 0
        %1173 = vmatprep.subr.bf16.mxu0 0
        %1174 = vmatpush1.bf16.msra.mxu0 %v1157
        %1175 = vmatprep.subr.bf16.mxu0 0
        %1176 = vmatpush2.bf16.msra.mxu0 0
        %1177 = vmatprep.subr.bf16.mxu0 0
        %1178 = vmatpush2.bf16.msra.mxu0 0
        %1179 = vmatprep.subr.bf16.mxu0 0
        %1180 = vmatpush2.bf16.msra.mxu0 0
        %1181 = vmatprep.subr.bf16.mxu0 0
        %1182 = vmatpush2.bf16.msra.mxu0 0
        %1183 = vmatprep.subr.bf16.mxu0 0
        %1184 = vmatpush2.bf16.msra.mxu0 0
        %1185 = vmatprep.subr.bf16.mxu0 0
        %1186 = vmatpush2.bf16.msra.mxu0 0
        %1187 = vmatprep.subr.bf16.mxu0 0
        %1188 = vmatpush2.bf16.msra.mxu0 0
        %1189 = vmatprep.subr.bf16.mxu0 0
        %1190 = vmatpush2.bf16.msra.mxu0 0
        %1191 = vmatprep.mubr.bf16.mxu0 0
        %1192 = vmatmul.mubr.bf16.gmra.mxu0 %v1154
        %v1193 = vpop.f32.mrf.mxu0
        %v1194 = vadd.f32 0.0, %v1193
        %v1195 = vpop.f32.mrf.mxu0
        %v1196 = vpop.f32.mrf.mxu0
        %v1197 = vpop.f32.mrf.mxu0
        %1198 = vdwg.mxu0
        %v1199 = vpack.c.bf16 %v1050, %v1050
        %v1200 = vpack.c.bf16 %v1098, %v1098
        %v1201 = vpack.c.bf16 %v1146, %v1146
        %v1202 = vpack.c.bf16 %v1194, %v1194
        %v1203 = vld [vmem:[%s614] sm:$0xf]
        %v1204 = vld [vmem:[%s614 + $0x4] sm:$0xf]
        %v1205 = vld [vmem:[%s614 + $0x8] sm:$0xf]
        %v1206 = vld [vmem:[%s614 + $0xc] sm:$0xf]
        %v1208 = vsel %vm764, %v1199, 0
        %v1211 = vsel %vm1011, %v1203, 0
        %1213 = vmatprep.subr.bf16.mxu0 0
        %1214 = vmatpush1.bf16.msra.mxu0 0
        %1215 = vmatprep.subr.bf16.mxu0 0
        %1216 = vmatpush1.bf16.msra.mxu0 0
        %1217 = vmatprep.subr.bf16.mxu0 0
        %1218 = vmatpush1.bf16.msra.mxu0 0
        %1219 = vmatprep.subr.bf16.mxu0 0
        %1220 = vmatpush1.bf16.msra.mxu0 0
        %1221 = vmatprep.subr.bf16.mxu0 0
        %1222 = vmatpush1.bf16.msra.mxu0 0
        %1223 = vmatprep.subr.bf16.mxu0 0
        %1224 = vmatpush1.bf16.msra.mxu0 0
        %1225 = vmatprep.subr.bf16.mxu0 0
        %1226 = vmatpush1.bf16.msra.mxu0 0
        %1227 = vmatprep.subr.bf16.mxu0 0
        %1228 = vmatpush1.bf16.msra.mxu0 %v1211
        %1229 = vmatprep.subr.bf16.mxu0 0
        %1230 = vmatpush2.bf16.msra.mxu0 0
        %1231 = vmatprep.subr.bf16.mxu0 0
        %1232 = vmatpush2.bf16.msra.mxu0 0
        %1233 = vmatprep.subr.bf16.mxu0 0
        %1234 = vmatpush2.bf16.msra.mxu0 0
        %1235 = vmatprep.subr.bf16.mxu0 0
        %1236 = vmatpush2.bf16.msra.mxu0 0
        %1237 = vmatprep.subr.bf16.mxu0 0
        %1238 = vmatpush2.bf16.msra.mxu0 0
        %1239 = vmatprep.subr.bf16.mxu0 0
        %1240 = vmatpush2.bf16.msra.mxu0 0
        %1241 = vmatprep.subr.bf16.mxu0 0
        %1242 = vmatpush2.bf16.msra.mxu0 0
        %1243 = vmatprep.subr.bf16.mxu0 0
        %1244 = vmatpush2.bf16.msra.mxu0 0
        %1245 = vmatprep.mubr.bf16.mxu0 0
        %1246 = vmatmul.mubr.bf16.gmra.mxu0 %v1208
        %v1247 = vpop.f32.mrf.mxu0
        %v1248 = vadd.f32 0.0, %v1247
        %v1249 = vpop.f32.mrf.mxu0
        %v1250 = vpop.f32.mrf.mxu0
        %v1251 = vpop.f32.mrf.mxu0
        %1252 = vdwg.mxu0
        %v1254 = vsel %vm764, %v1200, 0
        %v1257 = vsel %vm1011, %v1204, 0
        %1259 = vmatprep.subr.bf16.mxu0 0
        %1260 = vmatpush1.bf16.msra.mxu0 0
        %1261 = vmatprep.subr.bf16.mxu0 0
        %1262 = vmatpush1.bf16.msra.mxu0 0
        %1263 = vmatprep.subr.bf16.mxu0 0
        %1264 = vmatpush1.bf16.msra.mxu0 0
        %1265 = vmatprep.subr.bf16.mxu0 0
        %1266 = vmatpush1.bf16.msra.mxu0 0
        %1267 = vmatprep.subr.bf16.mxu0 0
        %1268 = vmatpush1.bf16.msra.mxu0 0
        %1269 = vmatprep.subr.bf16.mxu0 0
        %1270 = vmatpush1.bf16.msra.mxu0 0
        %1271 = vmatprep.subr.bf16.mxu0 0
        %1272 = vmatpush1.bf16.msra.mxu0 0
        %1273 = vmatprep.subr.bf16.mxu0 0
        %1274 = vmatpush1.bf16.msra.mxu0 %v1257
        %1275 = vmatprep.subr.bf16.mxu0 0
        %1276 = vmatpush2.bf16.msra.mxu0 0
        %1277 = vmatprep.subr.bf16.mxu0 0
        %1278 = vmatpush2.bf16.msra.mxu0 0
        %1279 = vmatprep.subr.bf16.mxu0 0
        %1280 = vmatpush2.bf16.msra.mxu0 0
        %1281 = vmatprep.subr.bf16.mxu0 0
        %1282 = vmatpush2.bf16.msra.mxu0 0
        %1283 = vmatprep.subr.bf16.mxu0 0
        %1284 = vmatpush2.bf16.msra.mxu0 0
        %1285 = vmatprep.subr.bf16.mxu0 0
        %1286 = vmatpush2.bf16.msra.mxu0 0
        %1287 = vmatprep.subr.bf16.mxu0 0
        %1288 = vmatpush2.bf16.msra.mxu0 0
        %1289 = vmatprep.subr.bf16.mxu0 0
        %1290 = vmatpush2.bf16.msra.mxu0 0
        %1291 = vmatprep.mubr.bf16.mxu0 0
        %1292 = vmatmul.mubr.bf16.gmra.mxu0 %v1254
        %v1293 = vpop.f32.mrf.mxu0
        %v1294 = vadd.f32 0.0, %v1293
        %v1295 = vpop.f32.mrf.mxu0
        %v1296 = vpop.f32.mrf.mxu0
        %v1297 = vpop.f32.mrf.mxu0
        %1298 = vdwg.mxu0
        %v1300 = vsel %vm764, %v1201, 0
        %v1303 = vsel %vm1011, %v1205, 0
        %1305 = vmatprep.subr.bf16.mxu0 0
        %1306 = vmatpush1.bf16.msra.mxu0 0
        %1307 = vmatprep.subr.bf16.mxu0 0
        %1308 = vmatpush1.bf16.msra.mxu0 0
        %1309 = vmatprep.subr.bf16.mxu0 0
        %1310 = vmatpush1.bf16.msra.mxu0 0
        %1311 = vmatprep.subr.bf16.mxu0 0
        %1312 = vmatpush1.bf16.msra.mxu0 0
        %1313 = vmatprep.subr.bf16.mxu0 0
        %1314 = vmatpush1.bf16.msra.mxu0 0
        %1315 = vmatprep.subr.bf16.mxu0 0
        %1316 = vmatpush1.bf16.msra.mxu0 0
        %1317 = vmatprep.subr.bf16.mxu0 0
        %1318 = vmatpush1.bf16.msra.mxu0 0
        %1319 = vmatprep.subr.bf16.mxu0 0
        %1320 = vmatpush1.bf16.msra.mxu0 %v1303
        %1321 = vmatprep.subr.bf16.mxu0 0
        %1322 = vmatpush2.bf16.msra.mxu0 0
        %1323 = vmatprep.subr.bf16.mxu0 0
        %1324 = vmatpush2.bf16.msra.mxu0 0
        %1325 = vmatprep.subr.bf16.mxu0 0
        %1326 = vmatpush2.bf16.msra.mxu0 0
        %1327 = vmatprep.subr.bf16.mxu0 0
        %1328 = vmatpush2.bf16.msra.mxu0 0
        %1329 = vmatprep.subr.bf16.mxu0 0
        %1330 = vmatpush2.bf16.msra.mxu0 0
        %1331 = vmatprep.subr.bf16.mxu0 0
        %1332 = vmatpush2.bf16.msra.mxu0 0
        %1333 = vmatprep.subr.bf16.mxu0 0
        %1334 = vmatpush2.bf16.msra.mxu0 0
        %1335 = vmatprep.subr.bf16.mxu0 0
        %1336 = vmatpush2.bf16.msra.mxu0 0
        %1337 = vmatprep.mubr.bf16.mxu0 0
        %1338 = vmatmul.mubr.bf16.gmra.mxu0 %v1300
        %v1339 = vpop.f32.mrf.mxu0
        %v1340 = vadd.f32 0.0, %v1339
        %v1341 = vpop.f32.mrf.mxu0
        %v1342 = vpop.f32.mrf.mxu0
        %v1343 = vpop.f32.mrf.mxu0
        %1344 = vdwg.mxu0
        %v1346 = vsel %vm764, %v1202, 0
        %v1349 = vsel %vm1011, %v1206, 0
        %1351 = vmatprep.subr.bf16.mxu0 0
        %1352 = vmatpush1.bf16.msra.mxu0 0
        %1353 = vmatprep.subr.bf16.mxu0 0
        %1354 = vmatpush1.bf16.msra.mxu0 0
        %1355 = vmatprep.subr.bf16.mxu0 0
        %1356 = vmatpush1.bf16.msra.mxu0 0
        %1357 = vmatprep.subr.bf16.mxu0 0
        %1358 = vmatpush1.bf16.msra.mxu0 0
        %1359 = vmatprep.subr.bf16.mxu0 0
        %1360 = vmatpush1.bf16.msra.mxu0 0
        %1361 = vmatprep.subr.bf16.mxu0 0
        %1362 = vmatpush1.bf16.msra.mxu0 0
        %1363 = vmatprep.subr.bf16.mxu0 0
        %1364 = vmatpush1.bf16.msra.mxu0 0
        %1365 = vmatprep.subr.bf16.mxu0 0
        %1366 = vmatpush1.bf16.msra.mxu0 %v1349
        %1367 = vmatprep.subr.bf16.mxu0 0
        %1368 = vmatpush2.bf16.msra.mxu0 0
        %1369 = vmatprep.subr.bf16.mxu0 0
        %1370 = vmatpush2.bf16.msra.mxu0 0
        %1371 = vmatprep.subr.bf16.mxu0 0
        %1372 = vmatpush2.bf16.msra.mxu0 0
        %1373 = vmatprep.subr.bf16.mxu0 0
        %1374 = vmatpush2.bf16.msra.mxu0 0
        %1375 = vmatprep.subr.bf16.mxu0 0
        %1376 = vmatpush2.bf16.msra.mxu0 0
        %1377 = vmatprep.subr.bf16.mxu0 0
        %1378 = vmatpush2.bf16.msra.mxu0 0
        %1379 = vmatprep.subr.bf16.mxu0 0
        %1380 = vmatpush2.bf16.msra.mxu0 0
        %1381 = vmatprep.subr.bf16.mxu0 0
        %1382 = vmatpush2.bf16.msra.mxu0 0
        %1383 = vmatprep.mubr.bf16.mxu0 0
        %1384 = vmatmul.mubr.bf16.gmra.mxu0 %v1346
        %v1385 = vpop.f32.mrf.mxu0
        %v1386 = vadd.f32 0.0, %v1385
        %v1387 = vpop.f32.mrf.mxu0
        %v1388 = vpop.f32.mrf.mxu0
        %v1389 = vpop.f32.mrf.mxu0
        %1390 = vdwg.mxu0
        %v1391 = vadd.f32 %v1248, %v1294
        %v1392 = vadd.f32 %v1391, %v1340
        %v1393 = vadd.f32 %v1392, %v1386
        %v1394 = vld [vmem:[%s617] sm:$0x1]
        %v1396 = vlaneseq
        %v1397 = vshrl.u32 %v1396, 7
        %v1398 = vsub.s32 0, %v1397
        %v1399 = vrot.slane %v1394, %v1398
        %v1401 = vadd.f32 %v1393, %v1399
        %v1402 = vadd.f32 %v648, %v1401
        %v1403 = vsel %vm649, %v1402, 0.0
        %1404 = vadd.xlane.f32.xlu0 %v1403
        %v1405 = vpop.xlane.xlu0 %1404
        %v1406 = vmul.f32 %v1405, %v653
        %v1407 = vsub.f32 %v1402, %v1406
        %v1408 = vmul.f32 %v1407, %v1407
        %v1409 = vsel %vm649, %v1408, 0.0
        %1410 = vadd.xlane.f32.xlu0 %v1409
        %v1411 = vpop.xlane.xlu0 %1410
        %v1412 = vmul.f32 %v1411, %v653
        %v1413 = vadd.f32 %v1412, 1e-05
        %v1414 = vrsqrt.pop %v1413
        %v1415 = vmul.f32 %v1407, %v1414
        %v1416 = vld [vmem:[%s620] sm:$0x1]
        %v1418 = vlaneseq
        %v1419 = vshrl.u32 %v1418, 7
        %v1420 = vsub.s32 0, %v1419
        %v1421 = vrot.slane %v1416, %v1420
        %v1423 = vmul.f32 %v1415, %v1421
        %v1424 = vld [vmem:[%s623] sm:$0x1]
        %v1426 = vlaneseq
        %v1427 = vshrl.u32 %v1426, 7
        %v1428 = vsub.s32 0, %v1427
        %v1429 = vrot.slane %v1424, %v1428
        %v1431 = vadd.f32 %v1423, %v1429
        %v1432 = vpack.c.bf16 %v1431, %v1431
        %v1433 = vld [vmem:[%s628] sm:$0xf]
        %v1434 = vld [vmem:[%s628 + $0x4] sm:$0xf]
        %v1435 = vld [vmem:[%s628 + $0x8] sm:$0xf]
        %v1436 = vld [vmem:[%s628 + $0xc] sm:$0xf]
        %v1437 = vld [vmem:[%s631] sm:$0x1]
        %v1439 = vlaneseq
        %v1440 = vshrl.u32 %v1439, 7
        %v1441 = vsub.s32 0, %v1440
        %v1442 = vrot.slane %v1437, %v1441
        %v1448 = vunpack.c.l.b16 %v1433
        %v1449 = vunpack.c.l.b16 %v1434
        %v1450 = vunpack.c.l.b16 %v1435
        %v1451 = vunpack.c.l.b16 %v1436
        %v1452 = vpack.c.b16 %v1449, %v1448
        %v1453 = vpack.c.b16 %v1451, %v1450
        %v1457 = vsel %vm649, %v1432, 0
        %1459 = vmatprep.subr.bf16.mxu0 0
        %1460 = vmatpush1.bf16.msra.mxu0 0
        %1461 = vmatprep.subr.bf16.mxu0 0
        %1462 = vmatpush1.bf16.msra.mxu0 0
        %1463 = vmatprep.subr.bf16.mxu0 0
        %1464 = vmatpush1.bf16.msra.mxu0 0
        %1465 = vmatprep.subr.bf16.mxu0 0
        %1466 = vmatpush1.bf16.msra.mxu0 0
        %1467 = vmatprep.subr.bf16.mxu0 0
        %1468 = vmatpush1.bf16.msra.mxu0 0
        %1469 = vmatprep.subr.bf16.mxu0 0
        %1470 = vmatpush1.bf16.msra.mxu0 0
        %1471 = vmatprep.subr.bf16.mxu0 0
        %1472 = vmatpush1.bf16.msra.mxu0 %v1453
        %1473 = vmatprep.subr.bf16.mxu0 0
        %1474 = vmatpush1.bf16.msra.mxu0 %v1452
        %1475 = vmatprep.subr.bf16.mxu0 0
        %1476 = vmatpush2.bf16.msra.mxu0 0
        %1477 = vmatprep.subr.bf16.mxu0 0
        %1478 = vmatpush2.bf16.msra.mxu0 0
        %1479 = vmatprep.subr.bf16.mxu0 0
        %1480 = vmatpush2.bf16.msra.mxu0 0
        %1481 = vmatprep.subr.bf16.mxu0 0
        %1482 = vmatpush2.bf16.msra.mxu0 0
        %1483 = vmatprep.subr.bf16.mxu0 0
        %1484 = vmatpush2.bf16.msra.mxu0 0
        %1485 = vmatprep.subr.bf16.mxu0 0
        %1486 = vmatpush2.bf16.msra.mxu0 0
        %1487 = vmatprep.subr.bf16.mxu0 0
        %1488 = vmatpush2.bf16.msra.mxu0 0
        %1489 = vmatprep.subr.bf16.mxu0 0
        %1490 = vmatpush2.bf16.msra.mxu0 0
        %1491 = vmatprep.mubr.bf16.mxu0 0
        %1492 = vmatmul.mubr.bf16.gmra.mxu0 %v1457
        %v1493 = vpop.f32.mrf.mxu0
        %v1494 = vadd.f32 %v1442, %v1493
        %v1495 = vpop.f32.mrf.mxu0
        %v1496 = vpop.f32.mrf.mxu0
        %v1497 = vpop.f32.mrf.mxu0
        %1498 = vdwg.mxu0
        %v1499 = vmul.f32 %v1494, 1.702
        %v1500 = vxor.u32 %v1499, 2147483648
        %v1501 = vmul.f32 %v1500, 1.442695
        %v1502 = vpow.pop %v1501
        %v1503 = vadd.f32 %v1502, 1.0
        %v1504 = vrcp.pop %v1503
        %v1505 = vmul.f32 1.0, %v1504
        %v1506 = vmul.f32 %v1494, %v1505
        %v1507 = vpack.c.bf16 %v1506, %v1506
        %v1508 = vld [vmem:[%s636] sm:$0xf]
        %v1509 = vld [vmem:[%s636 + $0x4] sm:$0xf]
        %v1510 = vld [vmem:[%s636 + $0x8] sm:$0xf]
        %v1511 = vld [vmem:[%s636 + $0xc] sm:$0xf]
        %v1512 = vld [vmem:[%s636 + $0x10] sm:$0xf]
        %v1513 = vld [vmem:[%s636 + $0x14] sm:$0xf]
        %v1514 = vld [vmem:[%s636 + $0x18] sm:$0xf]
        %v1515 = vld [vmem:[%s636 + $0x1c] sm:$0xf]
        %v1516 = vld [vmem:[%s636 + $0x20] sm:$0xf]
        %v1517 = vld [vmem:[%s636 + $0x24] sm:$0xf]
        %v1518 = vld [vmem:[%s636 + $0x28] sm:$0xf]
        %v1519 = vld [vmem:[%s636 + $0x2c] sm:$0xf]
        %v1520 = vld [vmem:[%s636 + $0x30] sm:$0xf]
        %v1521 = vld [vmem:[%s636 + $0x34] sm:$0xf]
        %v1522 = vld [vmem:[%s636 + $0x38] sm:$0xf]
        %v1523 = vld [vmem:[%s636 + $0x3c] sm:$0xf]
        %v1524 = vld [vmem:[%s639] sm:$0x1]
        %v1526 = vlaneseq
        %v1527 = vshrl.u32 %v1526, 7
        %v1528 = vsub.s32 0, %v1527
        %v1529 = vrot.slane %v1524, %v1528
        %v1547 = vunpack.c.l.b16 %v1508
        %v1548 = vunpack.c.l.b16 %v1509
        %v1549 = vunpack.c.l.b16 %v1510
        %v1550 = vunpack.c.l.b16 %v1511
        %v1551 = vunpack.c.l.b16 %v1512
        %v1552 = vunpack.c.l.b16 %v1513
        %v1553 = vunpack.c.l.b16 %v1514
        %v1554 = vunpack.c.l.b16 %v1515
        %v1555 = vunpack.c.l.b16 %v1516
        %v1556 = vunpack.c.l.b16 %v1517
        %v1557 = vunpack.c.l.b16 %v1518
        %v1558 = vunpack.c.l.b16 %v1519
        %v1559 = vunpack.c.l.b16 %v1520
        %v1560 = vunpack.c.l.b16 %v1521
        %v1561 = vunpack.c.l.b16 %v1522
        %v1562 = vunpack.c.l.b16 %v1523
        %v1563 = vpack.c.b16 %v1548, %v1547
        %v1564 = vpack.c.b16 %v1550, %v1549
        %v1565 = vpack.c.b16 %v1552, %v1551
        %v1566 = vpack.c.b16 %v1554, %v1553
        %v1567 = vpack.c.b16 %v1556, %v1555
        %v1568 = vpack.c.b16 %v1558, %v1557
        %v1569 = vpack.c.b16 %v1560, %v1559
        %v1570 = vpack.c.b16 %v1562, %v1561
        %1579 = vmatprep.subr.bf16.mxu0 0
        %1580 = vmatpush1.bf16.msra.mxu0 %v1570
        %1581 = vmatprep.subr.bf16.mxu0 0
        %1582 = vmatpush1.bf16.msra.mxu0 %v1569
        %1583 = vmatprep.subr.bf16.mxu0 0
        %1584 = vmatpush1.bf16.msra.mxu0 %v1568
        %1585 = vmatprep.subr.bf16.mxu0 0
        %1586 = vmatpush1.bf16.msra.mxu0 %v1567
        %1587 = vmatprep.subr.bf16.mxu0 0
        %1588 = vmatpush1.bf16.msra.mxu0 %v1566
        %1589 = vmatprep.subr.bf16.mxu0 0
        %1590 = vmatpush1.bf16.msra.mxu0 %v1565
        %1591 = vmatprep.subr.bf16.mxu0 0
        %1592 = vmatpush1.bf16.msra.mxu0 %v1564
        %1593 = vmatprep.subr.bf16.mxu0 0
        %1594 = vmatpush1.bf16.msra.mxu0 %v1563
        %1595 = vmatprep.subr.bf16.mxu0 0
        %1596 = vmatpush2.bf16.msra.mxu0 0
        %1597 = vmatprep.subr.bf16.mxu0 0
        %1598 = vmatpush2.bf16.msra.mxu0 0
        %1599 = vmatprep.subr.bf16.mxu0 0
        %1600 = vmatpush2.bf16.msra.mxu0 0
        %1601 = vmatprep.subr.bf16.mxu0 0
        %1602 = vmatpush2.bf16.msra.mxu0 0
        %1603 = vmatprep.subr.bf16.mxu0 0
        %1604 = vmatpush2.bf16.msra.mxu0 0
        %1605 = vmatprep.subr.bf16.mxu0 0
        %1606 = vmatpush2.bf16.msra.mxu0 0
        %1607 = vmatprep.subr.bf16.mxu0 0
        %1608 = vmatpush2.bf16.msra.mxu0 0
        %1609 = vmatprep.subr.bf16.mxu0 0
        %1610 = vmatpush2.bf16.msra.mxu0 0
        %1611 = vmatprep.mubr.bf16.mxu0 0
        %1612 = vmatmul.mubr.bf16.gmra.mxu0 %v1507
        %v1613 = vpop.f32.mrf.mxu0
        %v1614 = vadd.f32 %v1529, %v1613
        %v1615 = vpop.f32.mrf.mxu0
        %v1616 = vpop.f32.mrf.mxu0
        %v1617 = vpop.f32.mrf.mxu0
        %1618 = vdwg.mxu0
        %v1619 = vadd.f32 %v1402, %v1614
        %1620 = vst.msk [vmem:[#allocation2] sm:$0xff] %vm649, %v1619
        %p1621 = scmp.eq.s32.totalorder %s32, 1
        // Predicated region
        $region77: #{tpu_custom_call.1} parent=71 // pred_check
          %p1622 = pneg %p1621
        $region78: #{tpu_custom_call.1} parent=71 // pred_check_branch
          %1624 = sbr.rel (%p1622) target = $region80
        $region79: #{tpu_custom_call.1} parent=71 // pred_region
          %1625 = vst.msk [vmem:[%s591] sm:$0xff] %vm649, %v1619
        $region80: #{tpu_custom_call.1} parent=71 // pred_fallthru
          _
        %s1626 = sand.u32 %s385, 1
        %s1627 = scalar_lea.sflag [#allocation4], %s1626
        %s1628 = sand.u32 %s385, 1
        %s1629 = smul.addr %s1628, 8
        %s1630 = scalar_lea.vmem [#allocation3], %s1629
        // Predicated region
        $region81: #{tpu_custom_call.1} parent=71 // pred_check
          %p1631 = pneg %p395
        $region82: #{tpu_custom_call.1} parent=71 // pred_check_branch
          %1633 = sbr.rel (%p1631) target = $region84
        $region83: #{tpu_custom_call.1} parent=71 // pred_region
          %s1635 = ssub.s32 128, 128
          %1636 = vsyncadd %s1627, %s1635
          %s1637 = smul.addr %s31, 128
          %s1638 = scalar_lea.hbm %s13, %s1637
          %s1640 = sshll.u32 %s1630, 4
          %s1641 = int_to_ptr.vmem [resolvable:$true] %s1640
          %1643 = dma.vmem_to_hbm [thread:$0]  %s1641, 128, %s1638, %s1627
        $region84: #{tpu_custom_call.1} parent=71 // pred_fallthru
          _
      $region72: #{tpu_custom_call.1} parent=5 // pred_fallthru
        _
      %p1644 = scmp.le.s32.totalorder 2, %s22
      // Predicated region
      $region85: #{tpu_custom_call.1} parent=5 // pred_check
        %p1645 = pneg %p1644
      $region86: #{tpu_custom_call.1} parent=5 // pred_check_branch
        %1647 = sbr.rel (%p1645) target = $region88
      $region87: #{tpu_custom_call.1} parent=5 // pred_region
        %s1648 = ssub.s32 %s22, 2
        // Predicated region
        $region89: #{tpu_custom_call.1} parent=87 // pred_check
          %p1649 = pneg %p401
        $region90: #{tpu_custom_call.1} parent=87 // pred_check_branch
          %1651 = sbr.rel (%p1649) target = $region92
        $region91: #{tpu_custom_call.1} parent=87 // pred_region
          %s1652 = sand.u32 %s386, 1
          %s1653 = scalar_lea.sflag [#allocation4], %s1652
          %s1654 = sand.u32 %s386, 1
          %s1655 = smul.addr %s1654, 8
          %s1656 = scalar_lea.vmem [#allocation3], %s1655
          %1657 = dma.done %s1653, 128
        $region92: #{tpu_custom_call.1} parent=87 // pred_fallthru
          _
      $region88: #{tpu_custom_call.1} parent=5 // pred_fallthru
        _
    $region6: #{tpu_custom_call.1} parent=1 // loop_footer
      %s26 = sadd.s32 1, %s22
    $region7: #{tpu_custom_call.1} parent=1 // loop_footer_branch
      %21 = sbr.rel target = $region3
    $region8: #{tpu_custom_call.1} parent=1 // loop_exit
      _
    %1658 = vsyncpa [#allocation4], 1
    %s1659 = scalar_lea.sflag [#allocation4], 1
    %1660 = vsyncpa %s1659, 1

</llo_original>
